<compile_context>
chip_gen: v6e
topology: v6e:2x2x1
jax: 0.10.0
libtpu: 0.0.40
codegen_flags: <defaults>
</compile_context>

<pallas_src>
import jax
import jax.numpy as jnp
from jax import lax
from jax.experimental import pallas as pl
from jax.experimental.pallas import tpu as pltpu
import numpy as np

ALPHA = 1.0
TOL = 1e-5
MAX_ITER = 50
M_PARAM = 1.0        # MONSingleFc default m
CHECK_EVERY = 2      # PR steps per convergence check (max_iter % CHECK_EVERY == 0)


def _round_up(a, b):
    return (a + b - 1) // b * b


def _make_pr_kernel(alpha, tol, max_iter, tile_rows, check_every):
    tol2 = float(tol) * float(tol)
    K = max(1, int(check_every))

    def kernel(nvalid_ref, x_ref, uwT_ref, ub_ref, winvT_ref, wT_ref, out_ref):
        x = x_ref[...]
        winvT = winvT_ref[...]
        d = winvT.shape[-1]

        # Row-validity mask: padded batch rows get bias = 0, so they remain exactly
        # zero through the whole PR iteration and contribute nothing to the norms.
        row0 = pl.program_id(0) * tile_rows
        rows = lax.broadcasted_iota(jnp.int32, (tile_rows, d), 0) + row0
        valid = rows < nvalid_ref[0]

        # bias = U(x); padded lanes of uwT/ub are zero -> padded channels stay zero.
        bias = jnp.dot(x, uwT_ref[...], preferred_element_type=jnp.float32) + ub_ref[...]
        bias = jnp.where(valid, bias, 0.0)
        ab = alpha * bias                          # loop-invariant, hoisted

        def pr_step(z, u):
            u12 = 2.0 * z - u
            z12 = jnp.dot(u12 + ab, winvT, preferred_element_type=jnp.float32)
            u_new = 2.0 * z12 - u12
            return jnp.maximum(u_new, 0.0), u_new  # (zn, u)

        def cond(carry):
            _, _, num2, den2, it = carry
            # Full reduce + vector->scalar hop only here (once per K iterations).
            # ||zn - z||^2 > tol^2 * ||zn||^2  (1e-6 epsilon absorbed; benign)
            return jnp.logical_and(jnp.sum(num2) > tol2 * jnp.sum(den2),
                                   it < max_iter)

        def body(carry):
            z, u, _, _, it = carry
            for _ in range(K - 1):                 # un-checked steps (unrolled)
                z, u = pr_step(z, u)
            z_prev = z
            z, u = pr_step(z, u)                   # checked step
            diff = z - z_prev                      # formed only on check steps
            num2 = jnp.sum(diff * diff, axis=0, keepdims=True)   # (1, d) partials
            den2 = jnp.sum(z * z, axis=0, keepdims=True)
            return (z, u, num2, den2, it + K)

        init = (jnp.zeros_like(bias), jnp.zeros_like(bias),
                jnp.ones((1, d), jnp.float32), jnp.zeros((1, d), jnp.float32),
                jnp.asarray(0, jnp.int32))
        z, _, _, _, _ = lax.while_loop(cond, body, init)

        # out = relu(linear_module(x, z)) = relu(bias + z @ W.T)
        zl = bias + jnp.dot(z, wT_ref[...], preferred_element_type=jnp.float32)
        out_ref[...] = jnp.maximum(zl, 0.0).astype(out_ref.dtype)

    return kernel


def mon_pr_forward(x, U_w, U_b, A_w, B_w, m=M_PARAM, alpha=ALPHA,
                   tol=TOL, max_iter=MAX_ITER, tile_rows=None,
                   check_every=CHECK_EVERY):
    """x: (N, in_dim) f32. Returns (N, out_dim) f32."""
    out_dim, in_dim = U_w.shape
    n = x.shape[0]

    # ---- parameter setup (plain JAX: matrix assembly + inverse) ----
    I = jnp.eye(out_dim, dtype=jnp.float32)
    W = (1.0 - m) * I - A_w.T @ A_w + B_w - B_w.T
    Winv = jnp.linalg.inv((1.0 + alpha) * I - alpha * W)   # init_inverse(1+a, -a)

    # ---- lane-pad both dims to multiples of 128 (padded channels stay 0) ----
    d_pad = _round_up(out_dim, 128)
    k_pad = _round_up(in_dim, 128)
    uwT = jnp.zeros((k_pad, d_pad), jnp.float32).at[:in_dim, :out_dim].set(
        U_w.T.astype(jnp.float32))
    ub = jnp.zeros((1, d_pad), jnp.float32).at[:, :out_dim].set(
        U_b.reshape(1, out_dim).astype(jnp.float32))
    winvT = jnp.zeros((d_pad, d_pad), jnp.float32).at[:out_dim, :out_dim].set(
        Winv.T.astype(jnp.float32))
    wT = jnp.zeros((d_pad, d_pad), jnp.float32).at[:out_dim, :out_dim].set(
        W.T.astype(jnp.float32))

    # ---- per-generation VMEM sizing (128 MiB v5e/v6e, 64 MiB v7x) ----
    try:
        vmem_cap = int(pltpu.get_tpu_info().vmem_capacity_bytes)
    except Exception:
        vmem_cap = 64 * 1024 * 1024                    # conservative (v7x-sized)

    bpe = 4
    # worst-case (double-buffered) resident weights when sizing the tile
    weight_bytes = (k_pad * d_pad + 8 * d_pad + 2 * d_pad * d_pad) * bpe * 2
    # per-row: double-buffered x & out tiles + ~12 tile-sized loop temporaries
    per_row = (2 * k_pad + 2 * d_pad + 12 * d_pad) * bpe
    budget = (vmem_cap * 7) // 10
    avail = max(budget - weight_bytes, 8 * per_row)
    auto_rows = max(8, min(1024, (avail // per_row) // 8 * 8))
    if tile_rows is None:
        tile_rows = auto_rows
    tile_rows = max(8, min(int(tile_rows), auto_rows))

    n8 = _round_up(max(n, 1), 8)
    tile_rows = min(tile_rows, n8)
    if n8 >= 16:
        # guarantee >= 2 grid steps so both v7x TensorCores get work
        tile_rows = min(tile_rows, _round_up((n8 + 1) // 2, 8))
    tile_rows = max(8, (tile_rows // 8) * 8)

    n_pad = _round_up(n, tile_rows)
    grid = (n_pad // tile_rows,)
    x_p = jnp.zeros((n_pad, k_pad), jnp.float32).at[:n, :in_dim].set(
        x.astype(jnp.float32))
    nvalid = jnp.array([n], jnp.int32)

    work = tile_rows * d_pad * bpe
    est = weight_bytes + 2 * tile_rows * k_pad * bpe + 2 * work + 12 * work
    vmem_limit = int(min(max(2 * est, 32 * 1024 * 1024), (vmem_cap * 85) // 100))
    vmem_limit = max(vmem_limit, min(16 * 1024 * 1024, vmem_cap))

    kernel = _make_pr_kernel(alpha, tol, max_iter, tile_rows, check_every)
    out_shape = jax.ShapeDtypeStruct((n_pad, d_pad), jnp.float32)

    def run(single_buffer_weights):
        if single_buffer_weights:
            # weight blocks have a constant index_map -> fetched once; single-buffer
            def w_spec(shape):
                return pl.BlockSpec(shape, lambda i, nv: (0, 0),
                                    pipeline_mode=pl.Buffered(1))
        else:
            def w_spec(shape):
                return pl.BlockSpec(shape, lambda i, nv: (0, 0))

        gs = pltpu.PrefetchScalarGridSpec(
            num_scalar_prefetch=1,              # nvalid -> SMEM, used for row mask
            grid=grid,
            in_specs=[
                pl.BlockSpec((tile_rows, k_pad), lambda i, nv: (i, 0)),  # x rows
                w_spec((k_pad, d_pad)),                                  # U_w.T
                w_spec((1, d_pad)),                                      # U_b
                w_spec((d_pad, d_pad)),                                  # Winv.T
                w_spec((d_pad, d_pad)),                                  # W.T
            ],
            out_specs=pl.BlockSpec((tile_rows, d_pad), lambda i, nv: (i, 0)),
        )
        return pl.pallas_call(
            kernel,
            out_shape=out_shape,
            grid_spec=gs,
            compiler_params=pltpu.CompilerParams(
                dimension_semantics=("parallel",),
                vmem_limit_bytes=vmem_limit,
            ),
        )(nvalid, x_p, uwT, ub, winvT, wT)

    try:
        out_p = run(True)
    except Exception:
        # fallback for jax versions without pipeline_mode / Buffered(1) support
        out_p = run(False)

    return out_p[:n, :out_dim]


def mon_pr_forward_ref(x, U_w, U_b, A_w, B_w, m=M_PARAM, alpha=ALPHA,
                       tol=TOL, max_iter=MAX_ITER):
    """Pure-JAX reference mirroring the PyTorch loop (for sanity check)."""
    out_dim = U_w.shape[0]
    I = jnp.eye(out_dim, dtype=jnp.float32)
    W = (1.0 - m) * I - A_w.T @ A_w + B_w - B_w.T
    Winv = jnp.linalg.inv((1.0 + alpha) * I - alpha * W)
    bias = x @ U_w.T + U_b
    z = jnp.zeros_like(bias)
    u = jnp.zeros_like(bias)
    err = 1.0
    it = 0
    while err > tol and it < max_iter:
        u12 = 2 * z - u
        z12 = (u12 + alpha * bias) @ Winv.T
        u = 2 * z12 - u12
        zn = jnp.maximum(u, 0.0)
        err = float(jnp.linalg.norm(zn - z) / (1e-6 + jnp.linalg.norm(zn)))
        z = zn
        it += 1
    return jnp.maximum(bias + z @ W.T, 0.0)


# TODO(synk): the custom autograd Backward (inverse_transpose fixed point) is not
# implemented; only the forward pass is translated. Stats/timing/verbose omitted.
# Note: convergence is checked per batch tile and every CHECK_EVERY iterations
# (vs every iteration over the whole batch in the reference); extra iterations of
# the contractive PR map only tighten the fixed point, so outputs agree to ~tol.

if __name__ == "__main__":
    key = jax.random.PRNGKey(0)
    n_batch, in_dim, out_dim = 8, 32, 64

    k1, k2, k3, k4, k5 = jax.random.split(key, 5)
    x = jax.random.normal(k1, (n_batch, in_dim), dtype=jnp.float32)
    # Deterministic parameter init (shapes follow MONSingleFc.__init__).
    U_w = 0.1 * jax.random.normal(k2, (out_dim, in_dim), dtype=jnp.float32)
    U_b = 0.1 * jax.random.normal(k3, (out_dim,), dtype=jnp.float32)
    A_w = 0.1 * jax.random.normal(k4, (out_dim, out_dim), dtype=jnp.float32)
    B_w = 0.1 * jax.random.normal(k5, (out_dim, out_dim), dtype=jnp.float32)

    out = mon_pr_forward(x, U_w, U_b, A_w, B_w)
    out = jax.block_until_ready(out)

    ref = np.asarray(mon_pr_forward_ref(x, U_w, U_b, A_w, B_w))
    assert out.shape == (n_batch, out_dim)
    assert np.allclose(np.asarray(out), ref, atol=1e-3, rtol=1e-3)

    print("KERNEL_OK")
</pallas_src>

<mosaic_0001>
module attributes {stable_mosaic.version = 11 : i64} {
  func.func @kernel(%arg0: i32, %arg1: memref<1xi32, #tpu.memory_space<smem>>, %arg2: memref<8x128xf32, #tpu.memory_space<vmem>>, %arg3: memref<128x128xf32, #tpu.memory_space<vmem>>, %arg4: memref<1x128xf32, #tpu.memory_space<vmem>>, %arg5: memref<128x128xf32, #tpu.memory_space<vmem>>, %arg6: memref<128x128xf32, #tpu.memory_space<vmem>>, %arg7: memref<8x128xf32, #tpu.memory_space<vmem>>) attributes {dimension_semantics = [#tpu.dimension_semantics<parallel>], iteration_bounds = array<i64: 1>, scalar_prefetch = 1 : i64, scratch_operands = 0 : i64, tpu.core_type = #tpu.core_type<tc>, window_params = [{transform_indices = @transform_0, window_bounds = array<i64: 8, 128>}, {pipeline_mode = #tpu.pipeline_mode<synchronous>, transform_indices = @transform_1, window_bounds = array<i64: 128, 128>}, {pipeline_mode = #tpu.pipeline_mode<synchronous>, transform_indices = @transform_2, window_bounds = array<i64: 1, 128>}, {pipeline_mode = #tpu.pipeline_mode<synchronous>, transform_indices = @transform_3, window_bounds = array<i64: 128, 128>}, {pipeline_mode = #tpu.pipeline_mode<synchronous>, transform_indices = @transform_4, window_bounds = array<i64: 128, 128>}, {transform_indices = @transform_5, window_bounds = array<i64: 8, 128>}]} {
    %c0 = arith.constant 0 : index
    %c0_0 = arith.constant 0 : index
    %0 = vector.load %arg2[%c0, %c0_0] : memref<8x128xf32, #tpu.memory_space<vmem>>, vector<8x128xf32>
    %c0_1 = arith.constant 0 : index
    %c0_2 = arith.constant 0 : index
    %1 = vector.load %arg5[%c0_1, %c0_2] : memref<128x128xf32, #tpu.memory_space<vmem>>, vector<128x128xf32>
    %c8_i32 = arith.constant 8 : i32
    %2 = arith.muli %arg0, %c8_i32 : i32
    %3 = tpu.iota {dimensions = array<i32: 0>} : vector<8x128xi32>
    %4 = vector.broadcast %2 : i32 to vector<8x128xi32>
    %5 = arith.addi %3, %4 : vector<8x128xi32>
    %c0_3 = arith.constant 0 : index
    %6 = memref.load %arg1[%c0_3] : memref<1xi32, #tpu.memory_space<smem>>
    %7 = vector.broadcast %6 : i32 to vector<8x128xi32>
    %8 = arith.cmpi slt, %5, %7 : vector<8x128xi32>
    %c0_4 = arith.constant 0 : index
    %c0_5 = arith.constant 0 : index
    %9 = vector.load %arg3[%c0_4, %c0_5] : memref<128x128xf32, #tpu.memory_space<vmem>>, vector<128x128xf32>
    %cst = arith.constant dense<0.000000e+00> : vector<8x128xf32>
    %10 = tpu.matmul %0, %9, %cst {dimension_numbers = #tpu.dot_dimension_numbers<[1], [0], [0], [1], [0, 0, 1, 1], [], []>} : vector<8x128xf32>, vector<128x128xf32>, vector<8x128xf32> -> vector<8x128xf32>
    %c0_6 = arith.constant 0 : index
    %c0_7 = arith.constant 0 : index
    %11 = vector.load %arg4[%c0_6, %c0_7] : memref<1x128xf32, #tpu.memory_space<vmem>>, vector<1x128xf32>
    %12 = vector.broadcast %11 : vector<1x128xf32> to vector<8x128xf32>
    %13 = arith.addf %10, %12 : vector<8x128xf32>
    %cst_8 = arith.constant 0.000000e+00 : f32
    %14 = vector.broadcast %cst_8 : f32 to vector<8x128xf32>
    %15 = arith.select %8, %13, %14 : vector<8x128xi1>, vector<8x128xf32>
    %cst_9 = arith.constant 1.000000e+00 : f32
    %16 = vector.broadcast %cst_9 : f32 to vector<8x128xf32>
    %17 = arith.mulf %16, %15 : vector<8x128xf32>
    %cst_10 = arith.constant 0.000000e+00 : f32
    %18 = vector.broadcast %cst_10 : f32 to vector<8x128xf32>
    %cst_11 = arith.constant 0.000000e+00 : f32
    %19 = vector.broadcast %cst_11 : f32 to vector<8x128xf32>
    %cst_12 = arith.constant 1.000000e+00 : f32
    %20 = vector.broadcast %cst_12 : f32 to vector<1x128xf32>
    %cst_13 = arith.constant 0.000000e+00 : f32
    %21 = vector.broadcast %cst_13 : f32 to vector<1x128xf32>
    %c0_i32 = arith.constant 0 : i32
    %22:5 = scf.while (%arg8 = %18, %arg9 = %19, %arg10 = %20, %arg11 = %21, %arg12 = %c0_i32) : (vector<8x128xf32>, vector<8x128xf32>, vector<1x128xf32>, vector<1x128xf32>, i32) -> (vector<8x128xf32>, vector<8x128xf32>, vector<1x128xf32>, vector<1x128xf32>, i32) {
      %29 = vector.shape_cast %arg10 : vector<1x128xf32> to vector<1x1x128xf32>
      %cst_20 = arith.constant dense<0.000000e+00> : vector<1xf32>
      %30 = vector.multi_reduction <add>, %29, %cst_20 [1, 2] : vector<1x1x128xf32> to vector<1xf32>
      %31 = vector.shape_cast %30 : vector<1xf32> to vector<1x1x1xf32>
      %32 = vector.extract %31[0, 0, 0] : f32 from vector<1x1x1xf32>
      %33 = vector.shape_cast %arg11 : vector<1x128xf32> to vector<1x1x128xf32>
      %cst_21 = arith.constant dense<0.000000e+00> : vector<1xf32>
      %34 = vector.multi_reduction <add>, %33, %cst_21 [1, 2] : vector<1x1x128xf32> to vector<1xf32>
      %35 = vector.shape_cast %34 : vector<1xf32> to vector<1x1x1xf32>
      %36 = vector.extract %35[0, 0, 0] : f32 from vector<1x1x1xf32>
      %cst_22 = arith.constant 1.000000e-10 : f32
      %37 = arith.mulf %cst_22, %36 : f32
      %38 = arith.cmpf ogt, %32, %37 : f32
      %c50_i32 = arith.constant 50 : i32
      %39 = arith.cmpi slt, %arg12, %c50_i32 : i32
      %40 = arith.andi %38, %39 : i1
      scf.condition(%40) %arg8, %arg9, %arg10, %arg11, %arg12 : vector<8x128xf32>, vector<8x128xf32>, vector<1x128xf32>, vector<1x128xf32>, i32
    } do {
    ^bb0(%arg8: vector<8x128xf32>, %arg9: vector<8x128xf32>, %arg10: vector<1x128xf32>, %arg11: vector<1x128xf32>, %arg12: i32):
      %cst_20 = arith.constant 2.000000e+00 : f32
      %29 = vector.broadcast %cst_20 : f32 to vector<8x128xf32>
      %30 = arith.mulf %29, %arg8 : vector<8x128xf32>
      %31 = arith.subf %30, %arg9 : vector<8x128xf32>
      %32 = arith.addf %31, %17 : vector<8x128xf32>
      %cst_21 = arith.constant dense<0.000000e+00> : vector<8x128xf32>
      %33 = tpu.matmul %32, %1, %cst_21 {dimension_numbers = #tpu.dot_dimension_numbers<[1], [0], [0], [1], [0, 0, 1, 1], [], []>} : vector<8x128xf32>, vector<128x128xf32>, vector<8x128xf32> -> vector<8x128xf32>
      %cst_22 = arith.constant 2.000000e+00 : f32
      %34 = vector.broadcast %cst_22 : f32 to vector<8x128xf32>
      %35 = arith.mulf %34, %33 : vector<8x128xf32>
      %36 = arith.subf %35, %31 : vector<8x128xf32>
      %cst_23 = arith.constant 0.000000e+00 : f32
      %37 = vector.broadcast %cst_23 : f32 to vector<8x128xf32>
      %38 = arith.maximumf %36, %37 : vector<8x128xf32>
      %cst_24 = arith.constant 2.000000e+00 : f32
      %39 = vector.broadcast %cst_24 : f32 to vector<8x128xf32>
      %40 = arith.mulf %39, %38 : vector<8x128xf32>
      %41 = arith.subf %40, %36 : vector<8x128xf32>
      %42 = arith.addf %41, %17 : vector<8x128xf32>
      %cst_25 = arith.constant dense<0.000000e+00> : vector<8x128xf32>
      %43 = tpu.matmul %42, %1, %cst_25 {dimension_numbers = #tpu.dot_dimension_numbers<[1], [0], [0], [1], [0, 0, 1, 1], [], []>} : vector<8x128xf32>, vector<128x128xf32>, vector<8x128xf32> -> vector<8x128xf32>
      %cst_26 = arith.constant 2.000000e+00 : f32
      %44 = vector.broadcast %cst_26 : f32 to vector<8x128xf32>
      %45 = arith.mulf %44, %43 : vector<8x128xf32>
      %46 = arith.subf %45, %41 : vector<8x128xf32>
      %cst_27 = arith.constant 0.000000e+00 : f32
      %47 = vector.broadcast %cst_27 : f32 to vector<8x128xf32>
      %48 = arith.maximumf %46, %47 : vector<8x128xf32>
      %49 = arith.subf %48, %38 : vector<8x128xf32>
      %50 = arith.mulf %49, %49 : vector<8x128xf32>
      %cst_28 = arith.constant dense<0.000000e+00> : vector<128xf32>
      %51 = vector.multi_reduction <add>, %50, %cst_28 [0] : vector<8x128xf32> to vector<128xf32>
      %52 = vector.shape_cast %51 : vector<128xf32> to vector<1x128xf32>
      %53 = arith.mulf %48, %48 : vector<8x128xf32>
      %cst_29 = arith.constant dense<0.000000e+00> : vector<128xf32>
      %54 = vector.multi_reduction <add>, %53, %cst_29 [0] : vector<8x128xf32> to vector<128xf32>
      %55 = vector.shape_cast %54 : vector<128xf32> to vector<1x128xf32>
      %c2_i32 = arith.constant 2 : i32
      %56 = arith.addi %arg12, %c2_i32 : i32
      scf.yield %48, %46, %52, %55, %56 : vector<8x128xf32>, vector<8x128xf32>, vector<1x128xf32>, vector<1x128xf32>, i32
    }
    %c0_14 = arith.constant 0 : index
    %c0_15 = arith.constant 0 : index
    %23 = vector.load %arg6[%c0_14, %c0_15] : memref<128x128xf32, #tpu.memory_space<vmem>>, vector<128x128xf32>
    %cst_16 = arith.constant dense<0.000000e+00> : vector<8x128xf32>
    %24 = tpu.matmul %22#0, %23, %cst_16 {dimension_numbers = #tpu.dot_dimension_numbers<[1], [0], [0], [1], [0, 0, 1, 1], [], []>} : vector<8x128xf32>, vector<128x128xf32>, vector<8x128xf32> -> vector<8x128xf32>
    %25 = arith.addf %15, %24 : vector<8x128xf32>
    %cst_17 = arith.constant 0.000000e+00 : f32
    %26 = vector.broadcast %cst_17 : f32 to vector<8x128xf32>
    %27 = arith.maximumf %25, %26 : vector<8x128xf32>
    %c0_18 = arith.constant 0 : index
    %c0_19 = arith.constant 0 : index
    %28 = vector.load %arg7[%c0_18, %c0_19] : memref<8x128xf32, #tpu.memory_space<vmem>>, vector<8x128xf32>
    tpu.vector_store %arg7[%c0_18, %c0_19], %27 {strides = array<i32>} : memref<8x128xf32, #tpu.memory_space<vmem>>, vector<8x128xf32>,
    return
  }
  func.func @transform_0(%arg0: i32, %arg1: memref<1xi32, #tpu.memory_space<smem>>) -> (i32, i32) {
    %c0_i32 = arith.constant 0 : i32
    %c0_i32_0 = arith.constant 0 : i32
    return %arg0, %c0_i32 : i32, i32
  }
  func.func @transform_1(%arg0: i32, %arg1: memref<1xi32, #tpu.memory_space<smem>>) -> (i32, i32) {
    %c0_i32 = arith.constant 0 : i32
    %c0_i32_0 = arith.constant 0 : i32
    %c0_i32_1 = arith.constant 0 : i32
    return %c0_i32, %c0_i32_0 : i32, i32
  }
  func.func @transform_2(%arg0: i32, %arg1: memref<1xi32, #tpu.memory_space<smem>>) -> (i32, i32) {
    %c0_i32 = arith.constant 0 : i32
    %c0_i32_0 = arith.constant 0 : i32
    %c0_i32_1 = arith.constant 0 : i32
    return %c0_i32, %c0_i32_0 : i32, i32
  }
  func.func @transform_3(%arg0: i32, %arg1: memref<1xi32, #tpu.memory_space<smem>>) -> (i32, i32) {
    %c0_i32 = arith.constant 0 : i32
    %c0_i32_0 = arith.constant 0 : i32
    %c0_i32_1 = arith.constant 0 : i32
    return %c0_i32, %c0_i32_0 : i32, i32
  }
  func.func @transform_4(%arg0: i32, %arg1: memref<1xi32, #tpu.memory_space<smem>>) -> (i32, i32) {
    %c0_i32 = arith.constant 0 : i32
    %c0_i32_0 = arith.constant 0 : i32
    %c0_i32_1 = arith.constant 0 : i32
    return %c0_i32, %c0_i32_0 : i32, i32
  }
  func.func @transform_5(%arg0: i32, %arg1: memref<1xi32, #tpu.memory_space<smem>>) -> (i32, i32) {
    %c0_i32 = arith.constant 0 : i32
    %c0_i32_0 = arith.constant 0 : i32
    return %arg0, %c0_i32 : i32, i32
  }
}

module attributes {stable_mosaic.version = 11 : i64} {
  func.func @kernel(%arg0: i32, %arg1: memref<1xi32, #tpu.memory_space<smem>>, %arg2: memref<8x128xf32, #tpu.memory_space<vmem>>, %arg3: memref<128x128xf32, #tpu.memory_space<vmem>>, %arg4: memref<1x128xf32, #tpu.memory_space<vmem>>, %arg5: memref<128x128xf32, #tpu.memory_space<vmem>>, %arg6: memref<128x128xf32, #tpu.memory_space<vmem>>, %arg7: memref<8x128xf32, #tpu.memory_space<vmem>>) attributes {dimension_semantics = [#tpu.dimension_semantics<parallel>], iteration_bounds = array<i64: 1>, scalar_prefetch = 1 : i64, scratch_operands = 0 : i64, tpu.core_type = #tpu.core_type<tc>, window_params = [{transform_indices = @transform_0, window_bounds = array<i64: 8, 128>}, {pipeline_mode = #tpu.pipeline_mode<synchronous>, transform_indices = @transform_1, window_bounds = array<i64: 128, 128>}, {pipeline_mode = #tpu.pipeline_mode<synchronous>, transform_indices = @transform_2, window_bounds = array<i64: 1, 128>}, {pipeline_mode = #tpu.pipeline_mode<synchronous>, transform_indices = @transform_3, window_bounds = array<i64: 128, 128>}, {pipeline_mode = #tpu.pipeline_mode<synchronous>, transform_indices = @transform_4, window_bounds = array<i64: 128, 128>}, {transform_indices = @transform_5, window_bounds = array<i64: 8, 128>}]} {
    %c0 = arith.constant 0 : index
    %c0_0 = arith.constant 0 : index
    %0 = vector.load %arg2[%c0, %c0_0] : memref<8x128xf32, #tpu.memory_space<vmem>>, vector<8x128xf32>
    %c0_1 = arith.constant 0 : index
    %c0_2 = arith.constant 0 : index
    %1 = vector.load %arg5[%c0_1, %c0_2] : memref<128x128xf32, #tpu.memory_space<vmem>>, vector<128x128xf32>
    %c8_i32 = arith.constant 8 : i32
    %2 = arith.muli %arg0, %c8_i32 : i32
    %3 = tpu.iota {dimensions = array<i32: 0>} : vector<8x128xi32>
    %4 = vector.broadcast %2 : i32 to vector<8x128xi32>
    %5 = arith.addi %3, %4 : vector<8x128xi32>
    %c0_3 = arith.constant 0 : index
    %6 = memref.load %arg1[%c0_3] : memref<1xi32, #tpu.memory_space<smem>>
    %7 = vector.broadcast %6 : i32 to vector<8x128xi32>
    %8 = arith.cmpi slt, %5, %7 : vector<8x128xi32>
    %c0_4 = arith.constant 0 : index
    %c0_5 = arith.constant 0 : index
    %9 = vector.load %arg3[%c0_4, %c0_5] : memref<128x128xf32, #tpu.memory_space<vmem>>, vector<128x128xf32>
    %cst = arith.constant dense<0.000000e+00> : vector<8x128xf32>
    %10 = tpu.matmul %0, %9, %cst {dimension_numbers = #tpu.dot_dimension_numbers<[1], [0], [0], [1], [0, 0, 1, 1], [], []>} : vector<8x128xf32>, vector<128x128xf32>, vector<8x128xf32> -> vector<8x128xf32>
    %c0_6 = arith.constant 0 : index
    %c0_7 = arith.constant 0 : index
    %11 = vector.load %arg4[%c0_6, %c0_7] : memref<1x128xf32, #tpu.memory_space<vmem>>, vector<1x128xf32>
    %12 = vector.broadcast %11 : vector<1x128xf32> to vector<8x128xf32>
    %13 = arith.addf %10, %12 : vector<8x128xf32>
    %cst_8 = arith.constant 0.000000e+00 : f32
    %14 = vector.broadcast %cst_8 : f32 to vector<8x128xf32>
    %15 = arith.select %8, %13, %14 : vector<8x128xi1>, vector<8x128xf32>
    %cst_9 = arith.constant 1.000000e+00 : f32
    %16 = vector.broadcast %cst_9 : f32 to vector<8x128xf32>
    %17 = arith.mulf %16, %15 : vector<8x128xf32>
    %cst_10 = arith.constant 0.000000e+00 : f32
    %18 = vector.broadcast %cst_10 : f32 to vector<8x128xf32>
    %cst_11 = arith.constant 0.000000e+00 : f32
    %19 = vector.broadcast %cst_11 : f32 to vector<8x128xf32>
    %cst_12 = arith.constant 1.000000e+00 : f32
    %20 = vector.broadcast %cst_12 : f32 to vector<1x128xf32>
    %cst_13 = arith.constant 0.000000e+00 : f32
    %21 = vector.broadcast %cst_13 : f32 to vector<1x128xf32>
    %c0_i32 = arith.constant 0 : i32
    %22:5 = scf.while (%arg8 = %18, %arg9 = %19, %arg10 = %20, %arg11 = %21, %arg12 = %c0_i32) : (vector<8x128xf32>, vector<8x128xf32>, vector<1x128xf32>, vector<1x128xf32>, i32) -> (vector<8x128xf32>, vector<8x128xf32>, vector<1x128xf32>, vector<1x128xf32>, i32) {
      %29 = vector.shape_cast %arg10 : vector<1x128xf32> to vector<1x1x128xf32>
      %cst_20 = arith.constant dense<0.000000e+00> : vector<1xf32>
      %30 = vector.multi_reduction <add>, %29, %cst_20 [1, 2] : vector<1x1x128xf32> to vector<1xf32>
      %31 = vector.shape_cast %30 : vector<1xf32> to vector<1x1x1xf32>
      %32 = vector.extract %31[0, 0, 0] : f32 from vector<1x1x1xf32>
      %33 = vector.shape_cast %arg11 : vector<1x128xf32> to vector<1x1x128xf32>
      %cst_21 = arith.constant dense<0.000000e+00> : vector<1xf32>
      %34 = vector.multi_reduction <add>, %33, %cst_21 [1, 2] : vector<1x1x128xf32> to vector<1xf32>
      %35 = vector.shape_cast %34 : vector<1xf32> to vector<1x1x1xf32>
      %36 = vector.extract %35[0, 0, 0] : f32 from vector<1x1x1xf32>
      %cst_22 = arith.constant 1.000000e-10 : f32
      %37 = arith.mulf %cst_22, %36 : f32
      %38 = arith.cmpf ogt, %32, %37 : f32
      %c50_i32 = arith.constant 50 : i32
      %39 = arith.cmpi slt, %arg12, %c50_i32 : i32
      %40 = arith.andi %38, %39 : i1
      scf.condition(%40) %arg8, %arg9, %arg10, %arg11, %arg12 : vector<8x128xf32>, vector<8x128xf32>, vector<1x128xf32>, vector<1x128xf32>, i32
    } do {
    ^bb0(%arg8: vector<8x128xf32>, %arg9: vector<8x128xf32>, %arg10: vector<1x128xf32>, %arg11: vector<1x128xf32>, %arg12: i32):
      %cst_20 = arith.constant 2.000000e+00 : f32
      %29 = vector.broadcast %cst_20 : f32 to vector<8x128xf32>
      %30 = arith.mulf %29, %arg8 : vector<8x128xf32>
      %31 = arith.subf %30, %arg9 : vector<8x128xf32>
      %32 = arith.addf %31, %17 : vector<8x128xf32>
      %cst_21 = arith.constant dense<0.000000e+00> : vector<8x128xf32>
      %33 = tpu.matmul %32, %1, %cst_21 {dimension_numbers = #tpu.dot_dimension_numbers<[1], [0], [0], [1], [0, 0, 1, 1], [], []>} : vector<8x128xf32>, vector<128x128xf32>, vector<8x128xf32> -> vector<8x128xf32>
      %cst_22 = arith.constant 2.000000e+00 : f32
      %34 = vector.broadcast %cst_22 : f32 to vector<8x128xf32>
      %35 = arith.mulf %34, %33 : vector<8x128xf32>
      %36 = arith.subf %35, %31 : vector<8x128xf32>
      %cst_23 = arith.constant 0.000000e+00 : f32
      %37 = vector.broadcast %cst_23 : f32 to vector<8x128xf32>
      %38 = arith.maximumf %36, %37 : vector<8x128xf32>
      %cst_24 = arith.constant 2.000000e+00 : f32
      %39 = vector.broadcast %cst_24 : f32 to vector<8x128xf32>
      %40 = arith.mulf %39, %38 : vector<8x128xf32>
      %41 = arith.subf %40, %36 : vector<8x128xf32>
      %42 = arith.addf %41, %17 : vector<8x128xf32>
      %cst_25 = arith.constant dense<0.000000e+00> : vector<8x128xf32>
      %43 = tpu.matmul %42, %1, %cst_25 {dimension_numbers = #tpu.dot_dimension_numbers<[1], [0], [0], [1], [0, 0, 1, 1], [], []>} : vector<8x128xf32>, vector<128x128xf32>, vector<8x128xf32> -> vector<8x128xf32>
      %cst_26 = arith.constant 2.000000e+00 : f32
      %44 = vector.broadcast %cst_26 : f32 to vector<8x128xf32>
      %45 = arith.mulf %44, %43 : vector<8x128xf32>
      %46 = arith.subf %45, %41 : vector<8x128xf32>
      %cst_27 = arith.constant 0.000000e+00 : f32
      %47 = vector.broadcast %cst_27 : f32 to vector<8x128xf32>
      %48 = arith.maximumf %46, %47 : vector<8x128xf32>
      %49 = arith.subf %48, %38 : vector<8x128xf32>
      %50 = arith.mulf %49, %49 : vector<8x128xf32>
      %cst_28 = arith.constant dense<0.000000e+00> : vector<128xf32>
      %51 = vector.multi_reduction <add>, %50, %cst_28 [0] : vector<8x128xf32> to vector<128xf32>
      %52 = vector.shape_cast %51 : vector<128xf32> to vector<1x128xf32>
      %53 = arith.mulf %48, %48 : vector<8x128xf32>
      %cst_29 = arith.constant dense<0.000000e+00> : vector<128xf32>
      %54 = vector.multi_reduction <add>, %53, %cst_29 [0] : vector<8x128xf32> to vector<128xf32>
      %55 = vector.shape_cast %54 : vector<128xf32> to vector<1x128xf32>
      %c2_i32 = arith.constant 2 : i32
      %56 = arith.addi %arg12, %c2_i32 : i32
      scf.yield %48, %46, %52, %55, %56 : vector<8x128xf32>, vector<8x128xf32>, vector<1x128xf32>, vector<1x128xf32>, i32
    }
    %c0_14 = arith.constant 0 : index
    %c0_15 = arith.constant 0 : index
    %23 = vector.load %arg6[%c0_14, %c0_15] : memref<128x128xf32, #tpu.memory_space<vmem>>, vector<128x128xf32>
    %cst_16 = arith.constant dense<0.000000e+00> : vector<8x128xf32>
    %24 = tpu.matmul %22#0, %23, %cst_16 {dimension_numbers = #tpu.dot_dimension_numbers<[1], [0], [0], [1], [0, 0, 1, 1], [], []>} : vector<8x128xf32>, vector<128x128xf32>, vector<8x128xf32> -> vector<8x128xf32>
    %25 = arith.addf %15, %24 : vector<8x128xf32>
    %cst_17 = arith.constant 0.000000e+00 : f32
    %26 = vector.broadcast %cst_17 : f32 to vector<8x128xf32>
    %27 = arith.maximumf %25, %26 : vector<8x128xf32>
    %c0_18 = arith.constant 0 : index
    %c0_19 = arith.constant 0 : index
    %28 = vector.load %arg7[%c0_18, %c0_19] : memref<8x128xf32, #tpu.memory_space<vmem>>, vector<8x128xf32>
    tpu.vector_store %arg7[%c0_18, %c0_19], %27 {strides = array<i32>} : memref<8x128xf32, #tpu.memory_space<vmem>>, vector<8x128xf32>,
    return
  }
  func.func @transform_0(%arg0: i32, %arg1: memref<1xi32, #tpu.memory_space<smem>>) -> (i32, i32) {
    %c0_i32 = arith.constant 0 : i32
    %c0_i32_0 = arith.constant 0 : i32
    return %arg0, %c0_i32 : i32, i32
  }
  func.func @transform_1(%arg0: i32, %arg1: memref<1xi32, #tpu.memory_space<smem>>) -> (i32, i32) {
    %c0_i32 = arith.constant 0 : i32
    %c0_i32_0 = arith.constant 0 : i32
    %c0_i32_1 = arith.constant 0 : i32
    return %c0_i32, %c0_i32_0 : i32, i32
  }
  func.func @transform_2(%arg0: i32, %arg1: memref<1xi32, #tpu.memory_space<smem>>) -> (i32, i32) {
    %c0_i32 = arith.constant 0 : i32
    %c0_i32_0 = arith.constant 0 : i32
    %c0_i32_1 = arith.constant 0 : i32
    return %c0_i32, %c0_i32_0 : i32, i32
  }
  func.func @transform_3(%arg0: i32, %arg1: memref<1xi32, #tpu.memory_space<smem>>) -> (i32, i32) {
    %c0_i32 = arith.constant 0 : i32
    %c0_i32_0 = arith.constant 0 : i32
    %c0_i32_1 = arith.constant 0 : i32
    return %c0_i32, %c0_i32_0 : i32, i32
  }
  func.func @transform_4(%arg0: i32, %arg1: memref<1xi32, #tpu.memory_space<smem>>) -> (i32, i32) {
    %c0_i32 = arith.constant 0 : i32
    %c0_i32_0 = arith.constant 0 : i32
    %c0_i32_1 = arith.constant 0 : i32
    return %c0_i32, %c0_i32_0 : i32, i32
  }
  func.func @transform_5(%arg0: i32, %arg1: memref<1xi32, #tpu.memory_space<smem>>) -> (i32, i32) {
    %c0_i32 = arith.constant 0 : i32
    %c0_i32_0 = arith.constant 0 : i32
    return %arg0, %c0_i32 : i32, i32
  }
}

</mosaic_0001>

<llo_original>
// kernel: tpu_custom_call.1
$region0: #{tpu_custom_call.1}
  #allocation0 [shape = 'u32[]', space=smem, size = 0x4, offset = 0x4, fixed_abs, tag = 'smem constant byte address 0x4 - core index']
  #allocation1 [shape = 'u32[144,128]{1,0:T(1,128)}', space=vmem, size = 0x12000, scoped, tag = 'internal scratch']
  #allocation2 [shape = 's32[1]{0}', space=sflag, size = 0x4, scoped, tag = 'scoped memory for tpu_custom_call.1']
  #allocation3 [shape = 's32[1]{0:T(128)S(6)}', space=smem, size = 0x200, scoped, tag = 'prefetched SMEM operand 0']
  %s0 = inlined_call_operand.<no memory space> [shape: s32[1], index: 0, kind: input, shape index: {}]
  %s1 = inlined_call_operand.hbm [shape: f32[8,128], index: 1, kind: input, shape index: {}]
  %s2 = inlined_call_operand.hbm [shape: f32[128,128], index: 2, kind: input, shape index: {}]
  %s3 = inlined_call_operand.vmem [shape: f32[1,128], index: 3, kind: input, shape index: {}]
  %s4 = inlined_call_operand.hbm [shape: f32[128,128], index: 4, kind: input, shape index: {}]
  %s5 = inlined_call_operand.hbm [shape: f32[128,128], index: 5, kind: input, shape index: {}]
  %s6 = inlined_call_operand.hbm [shape: f32[8,128], index: 6, kind: output, shape index: {}]
  %s7 = sld [smem:[#allocation0]]
  $region53: #{tpu_custom_call.1} parent=0
    _
  %s9 = ssub.s32 1, %s7
  %s10 = scalar_select 0, %s9, %s7
  %11 = sst [smem:[#allocation3]] %s0
  $region1: #{tpu_custom_call.1} parent=0
    #allocation4 [shape = 'u8[4096]{0}', space=vmem, size = 0x1000, scoped, tag = 'input window, operand 1, single buffered']
    #allocation5 [shape = 's32[1]{0}', space=sflag, size = 0x4, scoped, tag = 'scoped memory for tpu_custom_call.1']
    #allocation6 [shape = 's32[1]{0}', space=sflag, size = 0x4, scoped, tag = 'scoped memory for tpu_custom_call.1']
    #allocation7 [shape = 'u8[65536]{0}', space=vmem, size = 0x10000, scoped, tag = 'input window, operand 2, single buffered']
    #allocation8 [shape = 's32[1]{0}', space=sflag, size = 0x4, scoped, tag = 'scoped memory for tpu_custom_call.1']
    #allocation9 [shape = 'u8[65536]{0}', space=vmem, size = 0x10000, scoped, tag = 'input window, operand 4, single buffered']
    #allocation10 [shape = 'u8[65536]{0}', space=vmem, size = 0x10000, scoped, tag = 'input window, operand 5, single buffered']
    #allocation11 [shape = 's32[1]{0}', space=sflag, size = 0x4, scoped, tag = 'scoped memory for tpu_custom_call.1']
    #allocation12 [shape = 'u8[4096]{0}', space=vmem, size = 0x1000, scoped, tag = 'output window, operand 0, single buffered']
    %12 = vsyncpa [#allocation5], 0
    %13 = vsyncpa [#allocation8], 0
    %14 = vsyncpa [#allocation11], 0
    %15 = vsyncpa [#allocation6], 0
    // Predicated region
    $region2: #{tpu_custom_call.1} parent=1 // pred_check
      _
    $region3: #{tpu_custom_call.1} parent=1 // pred_check_branch
      %17 = sbr.rel (0) target = $region5
    $region4: #{tpu_custom_call.1} parent=1 // pred_region
      %s19 = ssub.s32 128, 128
      %20 = vsyncadd [#allocation5], %s19
      %s22 = sshll.u32 [#allocation4], 4
      %s23 = int_to_ptr.vmem [resolvable:$true] %s22
      %25 = dma.hbm_to_vmem [thread:$0]  %s1, 128, %s23, [#allocation5]
    $region5: #{tpu_custom_call.1} parent=1 // pred_fallthru
      _
    // Predicated region
    $region6: #{tpu_custom_call.1} parent=1 // pred_check
      _
    $region7: #{tpu_custom_call.1} parent=1 // pred_check_branch
      %27 = sbr.rel (0) target = $region9
    $region8: #{tpu_custom_call.1} parent=1 // pred_region
      %s29 = ssub.s32 2048, 2048
      %30 = vsyncadd [#allocation8], %s29
      %s31 = sshll.u32 [#allocation7], 4
      %s32 = int_to_ptr.vmem [resolvable:$true] %s31
      %37 = dma.hbm_to_vmem [thread:$0]  %s2, 2048, %s32, [#allocation8], 128, 128, 8
    $region9: #{tpu_custom_call.1} parent=1 // pred_fallthru
      _
    // Predicated region
    $region10: #{tpu_custom_call.1} parent=1 // pred_check
      _
    $region11: #{tpu_custom_call.1} parent=1 // pred_check_branch
      %39 = sbr.rel (0) target = $region13
    $region12: #{tpu_custom_call.1} parent=1 // pred_region
      _
    $region13: #{tpu_custom_call.1} parent=1 // pred_fallthru
      _
    // Predicated region
    $region14: #{tpu_custom_call.1} parent=1 // pred_check
      _
    $region15: #{tpu_custom_call.1} parent=1 // pred_check_branch
      %41 = sbr.rel (0) target = $region17
    $region16: #{tpu_custom_call.1} parent=1 // pred_region
      %s43 = ssub.s32 2048, 2048
      %44 = vsyncadd [#allocation8], %s43
      %s45 = sshll.u32 [#allocation9], 4
      %s46 = int_to_ptr.vmem [resolvable:$true] %s45
      %51 = dma.hbm_to_vmem [thread:$0]  %s4, 2048, %s46, [#allocation8], 128, 128, 8
    $region17: #{tpu_custom_call.1} parent=1 // pred_fallthru
      _
    // Predicated region
    $region18: #{tpu_custom_call.1} parent=1 // pred_check
      _
    $region19: #{tpu_custom_call.1} parent=1 // pred_check_branch
      %53 = sbr.rel (0) target = $region21
    $region20: #{tpu_custom_call.1} parent=1 // pred_region
      %s55 = ssub.s32 2048, 2048
      %56 = vsyncadd [#allocation11], %s55
      %s57 = sshll.u32 [#allocation10], 4
      %s58 = int_to_ptr.vmem [resolvable:$true] %s57
      %63 = dma.hbm_to_vmem [thread:$0]  %s5, 2048, %s58, [#allocation11], 128, 128, 8
    $region21: #{tpu_custom_call.1} parent=1 // pred_fallthru
      _
    // Predicated region
    $region22: #{tpu_custom_call.1} parent=1 // pred_check
      _
    $region23: #{tpu_custom_call.1} parent=1 // pred_check_branch
      %65 = sbr.rel (0) target = $region25
    $region24: #{tpu_custom_call.1} parent=1 // pred_region
      %66 = dma.done [#allocation5], 128
    $region25: #{tpu_custom_call.1} parent=1 // pred_fallthru
      _
    // Predicated region
    $region26: #{tpu_custom_call.1} parent=1 // pred_check
      _
    $region27: #{tpu_custom_call.1} parent=1 // pred_check_branch
      %68 = sbr.rel (0) target = $region29
    $region28: #{tpu_custom_call.1} parent=1 // pred_region
      %69 = dma.done [#allocation8], 2048
    $region29: #{tpu_custom_call.1} parent=1 // pred_fallthru
      _
    // Predicated region
    $region30: #{tpu_custom_call.1} parent=1 // pred_check
      _
    $region31: #{tpu_custom_call.1} parent=1 // pred_check_branch
      %71 = sbr.rel (0) target = $region33
    $region32: #{tpu_custom_call.1} parent=1 // pred_region
      %72 = dma.done [#allocation8], 2048
    $region33: #{tpu_custom_call.1} parent=1 // pred_fallthru
      _
    // Predicated region
    $region34: #{tpu_custom_call.1} parent=1 // pred_check
      _
    $region35: #{tpu_custom_call.1} parent=1 // pred_check_branch
      %74 = sbr.rel (0) target = $region37
    $region36: #{tpu_custom_call.1} parent=1 // pred_region
      %75 = dma.done [#allocation11], 2048
    $region37: #{tpu_custom_call.1} parent=1 // pred_fallthru
      _
    %v76 = vld [vmem:[#allocation4] sm:$0xff]
    %v77 = vld [vmem:[#allocation9] sm:$0xff]
    %v78 = vld [vmem:[#allocation9 + $0x8] sm:$0xff]
    %v79 = vld [vmem:[#allocation9 + $0x10] sm:$0xff]
    %v80 = vld [vmem:[#allocation9 + $0x18] sm:$0xff]
    %v81 = vld [vmem:[#allocation9 + $0x20] sm:$0xff]
    %v82 = vld [vmem:[#allocation9 + $0x28] sm:$0xff]
    %v83 = vld [vmem:[#allocation9 + $0x30] sm:$0xff]
    %v84 = vld [vmem:[#allocation9 + $0x38] sm:$0xff]
    %v85 = vld [vmem:[#allocation9 + $0x40] sm:$0xff]
    %v86 = vld [vmem:[#allocation9 + $0x48] sm:$0xff]
    %v87 = vld [vmem:[#allocation9 + $0x50] sm:$0xff]
    %v88 = vld [vmem:[#allocation9 + $0x58] sm:$0xff]
    %v89 = vld [vmem:[#allocation9 + $0x60] sm:$0xff]
    %v90 = vld [vmem:[#allocation9 + $0x68] sm:$0xff]
    %v91 = vld [vmem:[#allocation9 + $0x70] sm:$0xff]
    %v92 = vld [vmem:[#allocation9 + $0x78] sm:$0xff]
    %s93 = smul.u32 0, 8
    %v94 = vlaneseq
    %v95 = vshrl.u32 %v94, 7
    %v96 = vstv %s93
    %v97 = vadd.s32 %v95, %v96
    %s98 = sld [smem:[#allocation3]]
    %v99 = vstv %s98
    %vm100 = vcmp.lt.s32.totalorder %v97, %v99
    %v101 = vld [vmem:[#allocation7] sm:$0xff]
    %v102 = vld [vmem:[#allocation7 + $0x8] sm:$0xff]
    %v103 = vld [vmem:[#allocation7 + $0x10] sm:$0xff]
    %v104 = vld [vmem:[#allocation7 + $0x18] sm:$0xff]
    %v105 = vld [vmem:[#allocation7 + $0x20] sm:$0xff]
    %v106 = vld [vmem:[#allocation7 + $0x28] sm:$0xff]
    %v107 = vld [vmem:[#allocation7 + $0x30] sm:$0xff]
    %v108 = vld [vmem:[#allocation7 + $0x38] sm:$0xff]
    %v109 = vld [vmem:[#allocation7 + $0x40] sm:$0xff]
    %v110 = vld [vmem:[#allocation7 + $0x48] sm:$0xff]
    %v111 = vld [vmem:[#allocation7 + $0x50] sm:$0xff]
    %v112 = vld [vmem:[#allocation7 + $0x58] sm:$0xff]
    %v113 = vld [vmem:[#allocation7 + $0x60] sm:$0xff]
    %v114 = vld [vmem:[#allocation7 + $0x68] sm:$0xff]
    %v115 = vld [vmem:[#allocation7 + $0x70] sm:$0xff]
    %v116 = vld [vmem:[#allocation7 + $0x78] sm:$0xff]
    %v117 = vld [vmem:[%s3] sm:$0x1]
    %v119 = vlaneseq
    %v120 = vshrl.u32 %v119, 7
    %v121 = vsub.s32 0, %v120
    %v122 = vrot.slane %v117, %v121
    %124 = vmatprep.subr.mxu0 0.0
    %125 = vmatpush1.msra.mxu0 %v116
    %126 = vmatprep.subr.mxu0 0.0
    %127 = vmatpush1.msra.mxu0 %v115
    %128 = vmatprep.subr.mxu0 0.0
    %129 = vmatpush1.msra.mxu0 %v114
    %130 = vmatprep.subr.mxu0 0.0
    %131 = vmatpush1.msra.mxu0 %v113
    %132 = vmatprep.subr.mxu0 0.0
    %133 = vmatpush1.msra.mxu0 %v112
    %134 = vmatprep.subr.mxu0 0.0
    %135 = vmatpush1.msra.mxu0 %v111
    %136 = vmatprep.subr.mxu0 0.0
    %137 = vmatpush1.msra.mxu0 %v110
    %138 = vmatprep.subr.mxu0 0.0
    %139 = vmatpush1.msra.mxu0 %v109
    %140 = vmatprep.subr.mxu0 0.0
    %141 = vmatpush1.msra.mxu0 %v108
    %142 = vmatprep.subr.mxu0 0.0
    %143 = vmatpush1.msra.mxu0 %v107
    %144 = vmatprep.subr.mxu0 0.0
    %145 = vmatpush1.msra.mxu0 %v106
    %146 = vmatprep.subr.mxu0 0.0
    %147 = vmatpush1.msra.mxu0 %v105
    %148 = vmatprep.subr.mxu0 0.0
    %149 = vmatpush1.msra.mxu0 %v104
    %150 = vmatprep.subr.mxu0 0.0
    %151 = vmatpush1.msra.mxu0 %v103
    %152 = vmatprep.subr.mxu0 0.0
    %153 = vmatpush1.msra.mxu0 %v102
    %154 = vmatprep.subr.mxu0 0.0
    %155 = vmatpush1.msra.mxu0 %v101
    %156 = vmatprep.subr.mxu0 0.0
    %157 = vmatpush2.msra.mxu0 0.0
    %158 = vmatprep.subr.mxu0 0.0
    %159 = vmatpush2.msra.mxu0 0.0
    %160 = vmatprep.subr.mxu0 0.0
    %161 = vmatpush2.msra.mxu0 0.0
    %162 = vmatprep.subr.mxu0 0.0
    %163 = vmatpush2.msra.mxu0 0.0
    %164 = vmatprep.subr.mxu0 0.0
    %165 = vmatpush2.msra.mxu0 0.0
    %166 = vmatprep.subr.mxu0 0.0
    %167 = vmatpush2.msra.mxu0 0.0
    %168 = vmatprep.subr.mxu0 0.0
    %169 = vmatpush2.msra.mxu0 0.0
    %170 = vmatprep.subr.mxu0 0.0
    %171 = vmatpush2.msra.mxu0 0.0
    %172 = vmatprep.subr.mxu0 0.0
    %173 = vmatpush2.msra.mxu0 0.0
    %174 = vmatprep.subr.mxu0 0.0
    %175 = vmatpush2.msra.mxu0 0.0
    %176 = vmatprep.subr.mxu0 0.0
    %177 = vmatpush2.msra.mxu0 0.0
    %178 = vmatprep.subr.mxu0 0.0
    %179 = vmatpush2.msra.mxu0 0.0
    %180 = vmatprep.subr.mxu0 0.0
    %181 = vmatpush2.msra.mxu0 0.0
    %182 = vmatprep.subr.mxu0 0.0
    %183 = vmatpush2.msra.mxu0 0.0
    %184 = vmatprep.subr.mxu0 0.0
    %185 = vmatpush2.msra.mxu0 0.0
    %186 = vmatprep.subr.mxu0 0.0
    %187 = vmatpush2.msra.mxu0 0.0
    %188 = vmatprep.mubr.f32.mxu0 0.0
    %189 = vmatmul.mubr.f32.gmra.mxu0 %v76
    %v190 = vpop.f32.mrf.mxu0
    %v191 = vadd.f32 %v122, %v190
    %v192 = vpop.f32.mrf.mxu0
    %193 = vdwg.mxu0
    %v194 = vsel %vm100, %v191, 0.0
    // While loop
    $region38: #{tpu_custom_call.1} parent=1 // loop_pre_header
      _
    $region39: #{tpu_custom_call.1} parent=1 // loop_header
      %v196 = vphi 0.0, %v380
      %v197 = vphi 0.0, %v379
      %v198 = vphi 1.0, %v388
      %v199 = vphi 0.0, %v395
      %s200 = sphi 0, %s396
      %vm201 = vcmask 1040384
      %v202 = vsel %vm201, %v198, 0.0
      %203 = vadd.xlane.f32.xlu0 %v202
      %v204 = vpop.xlane.xlu0 %203
      %v205 = vrot.slane %v204, 4
      %v206 = vadd.f32 %v204, %v205
      %v207 = vrot.slane %v206, 2
      %v208 = vadd.f32 %v206, %v207
      %v209 = vrot.slane %v208, 1
      %v210 = vadd.f32 %v208, %v209
      %s211 = vtos %v210
      %v212 = vsel %vm201, %v199, 0.0
      %213 = vadd.xlane.f32.xlu0 %v212
      %v214 = vpop.xlane.xlu0 %213
      %v215 = vrot.slane %v214, 4
      %v216 = vadd.f32 %v214, %v215
      %v217 = vrot.slane %v216, 2
      %v218 = vadd.f32 %v216, %v217
      %v219 = vrot.slane %v218, 1
      %v220 = vadd.f32 %v218, %v219
      %s221 = vtos %v220
      %s222 = smul.f32 %s221, 1e-10
      %p223 = scmp.gt.f32.partialorder %s211, %s222
      %p224 = scmp.lt.s32.totalorder %s200, 50
      %p225 = pnand %p223, %p224
      %p226 = pneg %p225
    $region40: #{tpu_custom_call.1} parent=1 // loop_header_branch
      %228 = sbr.rel (%p225) target = $region44
    $region41: #{tpu_custom_call.1} parent=1 // loop_body
      %v229 = vmul.f32 %v196, 2.0
      %v230 = vsub.f32 %v229, %v197
      %v231 = vadd.f32 %v230, %v194
      %232 = vmatprep.subr.mxu0 0.0
      %233 = vmatpush1.msra.mxu0 %v92
      %234 = vmatprep.subr.mxu0 0.0
      %235 = vmatpush1.msra.mxu0 %v91
      %236 = vmatprep.subr.mxu0 0.0
      %237 = vmatpush1.msra.mxu0 %v90
      %238 = vmatprep.subr.mxu0 0.0
      %239 = vmatpush1.msra.mxu0 %v89
      %240 = vmatprep.subr.mxu0 0.0
      %241 = vmatpush1.msra.mxu0 %v88
      %242 = vmatprep.subr.mxu0 0.0
      %243 = vmatpush1.msra.mxu0 %v87
      %244 = vmatprep.subr.mxu0 0.0
      %245 = vmatpush1.msra.mxu0 %v86
      %246 = vmatprep.subr.mxu0 0.0
      %247 = vmatpush1.msra.mxu0 %v85
      %248 = vmatprep.subr.mxu0 0.0
      %249 = vmatpush1.msra.mxu0 %v84
      %250 = vmatprep.subr.mxu0 0.0
      %251 = vmatpush1.msra.mxu0 %v83
      %252 = vmatprep.subr.mxu0 0.0
      %253 = vmatpush1.msra.mxu0 %v82
      %254 = vmatprep.subr.mxu0 0.0
      %255 = vmatpush1.msra.mxu0 %v81
      %256 = vmatprep.subr.mxu0 0.0
      %257 = vmatpush1.msra.mxu0 %v80
      %258 = vmatprep.subr.mxu0 0.0
      %259 = vmatpush1.msra.mxu0 %v79
      %260 = vmatprep.subr.mxu0 0.0
      %261 = vmatpush1.msra.mxu0 %v78
      %262 = vmatprep.subr.mxu0 0.0
      %263 = vmatpush1.msra.mxu0 %v77
      %264 = vmatprep.subr.mxu0 0.0
      %265 = vmatpush2.msra.mxu0 0.0
      %266 = vmatprep.subr.mxu0 0.0
      %267 = vmatpush2.msra.mxu0 0.0
      %268 = vmatprep.subr.mxu0 0.0
      %269 = vmatpush2.msra.mxu0 0.0
      %270 = vmatprep.subr.mxu0 0.0
      %271 = vmatpush2.msra.mxu0 0.0
      %272 = vmatprep.subr.mxu0 0.0
      %273 = vmatpush2.msra.mxu0 0.0
      %274 = vmatprep.subr.mxu0 0.0
      %275 = vmatpush2.msra.mxu0 0.0
      %276 = vmatprep.subr.mxu0 0.0
      %277 = vmatpush2.msra.mxu0 0.0
      %278 = vmatprep.subr.mxu0 0.0
      %279 = vmatpush2.msra.mxu0 0.0
      %280 = vmatprep.subr.mxu0 0.0
      %281 = vmatpush2.msra.mxu0 0.0
      %282 = vmatprep.subr.mxu0 0.0
      %283 = vmatpush2.msra.mxu0 0.0
      %284 = vmatprep.subr.mxu0 0.0
      %285 = vmatpush2.msra.mxu0 0.0
      %286 = vmatprep.subr.mxu0 0.0
      %287 = vmatpush2.msra.mxu0 0.0
      %288 = vmatprep.subr.mxu0 0.0
      %289 = vmatpush2.msra.mxu0 0.0
      %290 = vmatprep.subr.mxu0 0.0
      %291 = vmatpush2.msra.mxu0 0.0
      %292 = vmatprep.subr.mxu0 0.0
      %293 = vmatpush2.msra.mxu0 0.0
      %294 = vmatprep.subr.mxu0 0.0
      %295 = vmatpush2.msra.mxu0 0.0
      %296 = vmatprep.mubr.f32.mxu0 0.0
      %297 = vmatmul.mubr.f32.gmra.mxu0 %v231
      %v298 = vpop.f32.mrf.mxu0
      %v299 = vadd.f32 0.0, %v298
      %v300 = vpop.f32.mrf.mxu0
      %301 = vdwg.mxu0
      %v302 = vmul.f32 %v299, 2.0
      %v303 = vsub.f32 %v302, %v230
      %v304 = vmax.f32 %v303, 0.0
      %v305 = vmul.f32 %v304, 2.0
      %v306 = vsub.f32 %v305, %v303
      %v307 = vadd.f32 %v306, %v194
      %308 = vmatprep.subr.mxu0 0.0
      %309 = vmatpush1.msra.mxu0 %v92
      %310 = vmatprep.subr.mxu0 0.0
      %311 = vmatpush1.msra.mxu0 %v91
      %312 = vmatprep.subr.mxu0 0.0
      %313 = vmatpush1.msra.mxu0 %v90
      %314 = vmatprep.subr.mxu0 0.0
      %315 = vmatpush1.msra.mxu0 %v89
      %316 = vmatprep.subr.mxu0 0.0
      %317 = vmatpush1.msra.mxu0 %v88
      %318 = vmatprep.subr.mxu0 0.0
      %319 = vmatpush1.msra.mxu0 %v87
      %320 = vmatprep.subr.mxu0 0.0
      %321 = vmatpush1.msra.mxu0 %v86
      %322 = vmatprep.subr.mxu0 0.0
      %323 = vmatpush1.msra.mxu0 %v85
      %324 = vmatprep.subr.mxu0 0.0
      %325 = vmatpush1.msra.mxu0 %v84
      %326 = vmatprep.subr.mxu0 0.0
      %327 = vmatpush1.msra.mxu0 %v83
      %328 = vmatprep.subr.mxu0 0.0
      %329 = vmatpush1.msra.mxu0 %v82
      %330 = vmatprep.subr.mxu0 0.0
      %331 = vmatpush1.msra.mxu0 %v81
      %332 = vmatprep.subr.mxu0 0.0
      %333 = vmatpush1.msra.mxu0 %v80
      %334 = vmatprep.subr.mxu0 0.0
      %335 = vmatpush1.msra.mxu0 %v79
      %336 = vmatprep.subr.mxu0 0.0
      %337 = vmatpush1.msra.mxu0 %v78
      %338 = vmatprep.subr.mxu0 0.0
      %339 = vmatpush1.msra.mxu0 %v77
      %340 = vmatprep.subr.mxu0 0.0
      %341 = vmatpush2.msra.mxu0 0.0
      %342 = vmatprep.subr.mxu0 0.0
      %343 = vmatpush2.msra.mxu0 0.0
      %344 = vmatprep.subr.mxu0 0.0
      %345 = vmatpush2.msra.mxu0 0.0
      %346 = vmatprep.subr.mxu0 0.0
      %347 = vmatpush2.msra.mxu0 0.0
      %348 = vmatprep.subr.mxu0 0.0
      %349 = vmatpush2.msra.mxu0 0.0
      %350 = vmatprep.subr.mxu0 0.0
      %351 = vmatpush2.msra.mxu0 0.0
      %352 = vmatprep.subr.mxu0 0.0
      %353 = vmatpush2.msra.mxu0 0.0
      %354 = vmatprep.subr.mxu0 0.0
      %355 = vmatpush2.msra.mxu0 0.0
      %356 = vmatprep.subr.mxu0 0.0
      %357 = vmatpush2.msra.mxu0 0.0
      %358 = vmatprep.subr.mxu0 0.0
      %359 = vmatpush2.msra.mxu0 0.0
      %360 = vmatprep.subr.mxu0 0.0
      %361 = vmatpush2.msra.mxu0 0.0
      %362 = vmatprep.subr.mxu0 0.0
      %363 = vmatpush2.msra.mxu0 0.0
      %364 = vmatprep.subr.mxu0 0.0
      %365 = vmatpush2.msra.mxu0 0.0
      %366 = vmatprep.subr.mxu0 0.0
      %367 = vmatpush2.msra.mxu0 0.0
      %368 = vmatprep.subr.mxu0 0.0
      %369 = vmatpush2.msra.mxu0 0.0
      %370 = vmatprep.subr.mxu0 0.0
      %371 = vmatpush2.msra.mxu0 0.0
      %372 = vmatprep.mubr.f32.mxu0 0.0
      %373 = vmatmul.mubr.f32.gmra.mxu0 %v307
      %v374 = vpop.f32.mrf.mxu0
      %v375 = vadd.f32 0.0, %v374
      %v376 = vpop.f32.mrf.mxu0
      %377 = vdwg.mxu0
      %v378 = vmul.f32 %v375, 2.0
      %v379 = vsub.f32 %v378, %v306
      %v380 = vmax.f32 %v379, 0.0
      %v381 = vsub.f32 %v380, %v304
      %v382 = vmul.f32 %v381, %v381
      %v383 = vrot.slane %v382, 4
      %v384 = vadd.f32 %v382, %v383
      %v385 = vrot.slane %v384, 2
      %v386 = vadd.f32 %v384, %v385
      %v387 = vrot.slane %v386, 1
      %v388 = vadd.f32 %v386, %v387
      %v389 = vmul.f32 %v380, %v380
      %v390 = vrot.slane %v389, 4
      %v391 = vadd.f32 %v389, %v390
      %v392 = vrot.slane %v391, 2
      %v393 = vadd.f32 %v391, %v392
      %v394 = vrot.slane %v393, 1
      %v395 = vadd.f32 %v393, %v394
      %s396 = sadd.s32 %s200, 2
    $region42: #{tpu_custom_call.1} parent=1 // loop_footer
      _
    $region43: #{tpu_custom_call.1} parent=1 // loop_footer_branch
      %195 = sbr.rel target = $region39
    $region44: #{tpu_custom_call.1} parent=1 // loop_exit
      _
    %v397 = vld [vmem:[#allocation10] sm:$0xff]
    %v398 = vld [vmem:[#allocation10 + $0x8] sm:$0xff]
    %v399 = vld [vmem:[#allocation10 + $0x10] sm:$0xff]
    %v400 = vld [vmem:[#allocation10 + $0x18] sm:$0xff]
    %v401 = vld [vmem:[#allocation10 + $0x20] sm:$0xff]
    %v402 = vld [vmem:[#allocation10 + $0x28] sm:$0xff]
    %v403 = vld [vmem:[#allocation10 + $0x30] sm:$0xff]
    %v404 = vld [vmem:[#allocation10 + $0x38] sm:$0xff]
    %v405 = vld [vmem:[#allocation10 + $0x40] sm:$0xff]
    %v406 = vld [vmem:[#allocation10 + $0x48] sm:$0xff]
    %v407 = vld [vmem:[#allocation10 + $0x50] sm:$0xff]
    %v408 = vld [vmem:[#allocation10 + $0x58] sm:$0xff]
    %v409 = vld [vmem:[#allocation10 + $0x60] sm:$0xff]
    %v410 = vld [vmem:[#allocation10 + $0x68] sm:$0xff]
    %v411 = vld [vmem:[#allocation10 + $0x70] sm:$0xff]
    %v412 = vld [vmem:[#allocation10 + $0x78] sm:$0xff]
    %413 = vmatprep.subr.mxu0 0.0
    %414 = vmatpush1.msra.mxu0 %v412
    %415 = vmatprep.subr.mxu0 0.0
    %416 = vmatpush1.msra.mxu0 %v411
    %417 = vmatprep.subr.mxu0 0.0
    %418 = vmatpush1.msra.mxu0 %v410
    %419 = vmatprep.subr.mxu0 0.0
    %420 = vmatpush1.msra.mxu0 %v409
    %421 = vmatprep.subr.mxu0 0.0
    %422 = vmatpush1.msra.mxu0 %v408
    %423 = vmatprep.subr.mxu0 0.0
    %424 = vmatpush1.msra.mxu0 %v407
    %425 = vmatprep.subr.mxu0 0.0
    %426 = vmatpush1.msra.mxu0 %v406
    %427 = vmatprep.subr.mxu0 0.0
    %428 = vmatpush1.msra.mxu0 %v405
    %429 = vmatprep.subr.mxu0 0.0
    %430 = vmatpush1.msra.mxu0 %v404
    %431 = vmatprep.subr.mxu0 0.0
    %432 = vmatpush1.msra.mxu0 %v403
    %433 = vmatprep.subr.mxu0 0.0
    %434 = vmatpush1.msra.mxu0 %v402
    %435 = vmatprep.subr.mxu0 0.0
    %436 = vmatpush1.msra.mxu0 %v401
    %437 = vmatprep.subr.mxu0 0.0
    %438 = vmatpush1.msra.mxu0 %v400
    %439 = vmatprep.subr.mxu0 0.0
    %440 = vmatpush1.msra.mxu0 %v399
    %441 = vmatprep.subr.mxu0 0.0
    %442 = vmatpush1.msra.mxu0 %v398
    %443 = vmatprep.subr.mxu0 0.0
    %444 = vmatpush1.msra.mxu0 %v397
    %445 = vmatprep.subr.mxu0 0.0
    %446 = vmatpush2.msra.mxu0 0.0
    %447 = vmatprep.subr.mxu0 0.0
    %448 = vmatpush2.msra.mxu0 0.0
    %449 = vmatprep.subr.mxu0 0.0
    %450 = vmatpush2.msra.mxu0 0.0
    %451 = vmatprep.subr.mxu0 0.0
    %452 = vmatpush2.msra.mxu0 0.0
    %453 = vmatprep.subr.mxu0 0.0
    %454 = vmatpush2.msra.mxu0 0.0
    %455 = vmatprep.subr.mxu0 0.0
    %456 = vmatpush2.msra.mxu0 0.0
    %457 = vmatprep.subr.mxu0 0.0
    %458 = vmatpush2.msra.mxu0 0.0
    %459 = vmatprep.subr.mxu0 0.0
    %460 = vmatpush2.msra.mxu0 0.0
    %461 = vmatprep.subr.mxu0 0.0
    %462 = vmatpush2.msra.mxu0 0.0
    %463 = vmatprep.subr.mxu0 0.0
    %464 = vmatpush2.msra.mxu0 0.0
    %465 = vmatprep.subr.mxu0 0.0
    %466 = vmatpush2.msra.mxu0 0.0
    %467 = vmatprep.subr.mxu0 0.0
    %468 = vmatpush2.msra.mxu0 0.0
    %469 = vmatprep.subr.mxu0 0.0
    %470 = vmatpush2.msra.mxu0 0.0
    %471 = vmatprep.subr.mxu0 0.0
    %472 = vmatpush2.msra.mxu0 0.0
    %473 = vmatprep.subr.mxu0 0.0
    %474 = vmatpush2.msra.mxu0 0.0
    %475 = vmatprep.subr.mxu0 0.0
    %476 = vmatpush2.msra.mxu0 0.0
    %477 = vmatprep.mubr.f32.mxu0 0.0
    %478 = vmatmul.mubr.f32.gmra.mxu0 %v196
    %v479 = vpop.f32.mrf.mxu0
    %v480 = vadd.f32 0.0, %v479
    %v481 = vpop.f32.mrf.mxu0
    %482 = vdwg.mxu0
    %v483 = vadd.f32 %v194, %v480
    %v484 = vmax.f32 %v483, 0.0
    %485 = vst [vmem:[#allocation12] sm:$0xff] %v484
    // Predicated region
    $region45: #{tpu_custom_call.1} parent=1 // pred_check
      _
    $region46: #{tpu_custom_call.1} parent=1 // pred_check_branch
      %487 = sbr.rel (0) target = $region48
    $region47: #{tpu_custom_call.1} parent=1 // pred_region
      %s489 = ssub.s32 128, 128
      %490 = vsyncadd [#allocation6], %s489
      %s492 = sshll.u32 [#allocation12], 4
      %s493 = int_to_ptr.vmem [resolvable:$true] %s492
      %495 = dma.vmem_to_hbm [thread:$0]  %s493, 128, %s6, [#allocation6]
    $region48: #{tpu_custom_call.1} parent=1 // pred_fallthru
      _
    // Predicated region
    $region49: #{tpu_custom_call.1} parent=1 // pred_check
      _
    $region50: #{tpu_custom_call.1} parent=1 // pred_check_branch
      %497 = sbr.rel (0) target = $region52
    $region51: #{tpu_custom_call.1} parent=1 // pred_region
      %498 = dma.done [#allocation6], 128
    $region52: #{tpu_custom_call.1} parent=1 // pred_fallthru
      _
    %499 = vsyncpa [#allocation5], 1
    %500 = vsyncpa [#allocation8], 1
    %501 = vsyncpa [#allocation11], 1
    %502 = vsyncpa [#allocation6], 1

// kernel: tpu_custom_call.1
$region0: #{tpu_custom_call.1}
  #allocation0 [shape = 'u32[]', space=smem, size = 0x4, offset = 0x4, fixed_abs, tag = 'smem constant byte address 0x4 - core index']
  #allocation1 [shape = 'u32[144,128]{1,0:T(1,128)}', space=vmem, size = 0x12000, scoped, tag = 'internal scratch']
  #allocation2 [shape = 's32[1]{0}', space=sflag, size = 0x4, scoped, tag = 'scoped memory for tpu_custom_call.1']
  #allocation3 [shape = 's32[1]{0:T(128)S(6)}', space=smem, size = 0x200, scoped, tag = 'prefetched SMEM operand 0']
  %s0 = inlined_call_operand.<no memory space> [shape: s32[1], index: 0, kind: input, shape index: {}]
  %s1 = inlined_call_operand.hbm [shape: f32[8,128], index: 1, kind: input, shape index: {}]
  %s2 = inlined_call_operand.hbm [shape: f32[128,128], index: 2, kind: input, shape index: {}]
  %s3 = inlined_call_operand.vmem [shape: f32[1,128], index: 3, kind: input, shape index: {}]
  %s4 = inlined_call_operand.hbm [shape: f32[128,128], index: 4, kind: input, shape index: {}]
  %s5 = inlined_call_operand.hbm [shape: f32[128,128], index: 5, kind: input, shape index: {}]
  %s6 = inlined_call_operand.hbm [shape: f32[8,128], index: 6, kind: output, shape index: {}]
  %s7 = sld [smem:[#allocation0]]
  $region53: #{tpu_custom_call.1} parent=0
    _
  %s9 = ssub.s32 1, %s7
  %s10 = scalar_select 0, %s9, %s7
  %11 = sst [smem:[#allocation3]] %s0
  $region1: #{tpu_custom_call.1} parent=0
    #allocation4 [shape = 'u8[4096]{0}', space=vmem, size = 0x1000, scoped, tag = 'input window, operand 1, single buffered']
    #allocation5 [shape = 's32[1]{0}', space=sflag, size = 0x4, scoped, tag = 'scoped memory for tpu_custom_call.1']
    #allocation6 [shape = 's32[1]{0}', space=sflag, size = 0x4, scoped, tag = 'scoped memory for tpu_custom_call.1']
    #allocation7 [shape = 'u8[65536]{0}', space=vmem, size = 0x10000, scoped, tag = 'input window, operand 2, single buffered']
    #allocation8 [shape = 's32[1]{0}', space=sflag, size = 0x4, scoped, tag = 'scoped memory for tpu_custom_call.1']
    #allocation9 [shape = 'u8[65536]{0}', space=vmem, size = 0x10000, scoped, tag = 'input window, operand 4, single buffered']
    #allocation10 [shape = 'u8[65536]{0}', space=vmem, size = 0x10000, scoped, tag = 'input window, operand 5, single buffered']
    #allocation11 [shape = 's32[1]{0}', space=sflag, size = 0x4, scoped, tag = 'scoped memory for tpu_custom_call.1']
    #allocation12 [shape = 'u8[4096]{0}', space=vmem, size = 0x1000, scoped, tag = 'output window, operand 0, single buffered']
    %12 = vsyncpa [#allocation5], 0
    %13 = vsyncpa [#allocation8], 0
    %14 = vsyncpa [#allocation11], 0
    %15 = vsyncpa [#allocation6], 0
    // Predicated region
    $region2: #{tpu_custom_call.1} parent=1 // pred_check
      _
    $region3: #{tpu_custom_call.1} parent=1 // pred_check_branch
      %17 = sbr.rel (0) target = $region5
    $region4: #{tpu_custom_call.1} parent=1 // pred_region
      %s19 = ssub.s32 128, 128
      %20 = vsyncadd [#allocation5], %s19
      %s22 = sshll.u32 [#allocation4], 4
      %s23 = int_to_ptr.vmem [resolvable:$true] %s22
      %25 = dma.hbm_to_vmem [thread:$0]  %s1, 128, %s23, [#allocation5]
    $region5: #{tpu_custom_call.1} parent=1 // pred_fallthru
      _
    // Predicated region
    $region6: #{tpu_custom_call.1} parent=1 // pred_check
      _
    $region7: #{tpu_custom_call.1} parent=1 // pred_check_branch
      %27 = sbr.rel (0) target = $region9
    $region8: #{tpu_custom_call.1} parent=1 // pred_region
      %s29 = ssub.s32 2048, 2048
      %30 = vsyncadd [#allocation8], %s29
      %s31 = sshll.u32 [#allocation7], 4
      %s32 = int_to_ptr.vmem [resolvable:$true] %s31
      %37 = dma.hbm_to_vmem [thread:$0]  %s2, 2048, %s32, [#allocation8], 128, 128, 8
    $region9: #{tpu_custom_call.1} parent=1 // pred_fallthru
      _
    // Predicated region
    $region10: #{tpu_custom_call.1} parent=1 // pred_check
      _
    $region11: #{tpu_custom_call.1} parent=1 // pred_check_branch
      %39 = sbr.rel (0) target = $region13
    $region12: #{tpu_custom_call.1} parent=1 // pred_region
      _
    $region13: #{tpu_custom_call.1} parent=1 // pred_fallthru
      _
    // Predicated region
    $region14: #{tpu_custom_call.1} parent=1 // pred_check
      _
    $region15: #{tpu_custom_call.1} parent=1 // pred_check_branch
      %41 = sbr.rel (0) target = $region17
    $region16: #{tpu_custom_call.1} parent=1 // pred_region
      %s43 = ssub.s32 2048, 2048
      %44 = vsyncadd [#allocation8], %s43
      %s45 = sshll.u32 [#allocation9], 4
      %s46 = int_to_ptr.vmem [resolvable:$true] %s45
      %51 = dma.hbm_to_vmem [thread:$0]  %s4, 2048, %s46, [#allocation8], 128, 128, 8
    $region17: #{tpu_custom_call.1} parent=1 // pred_fallthru
      _
    // Predicated region
    $region18: #{tpu_custom_call.1} parent=1 // pred_check
      _
    $region19: #{tpu_custom_call.1} parent=1 // pred_check_branch
      %53 = sbr.rel (0) target = $region21
    $region20: #{tpu_custom_call.1} parent=1 // pred_region
      %s55 = ssub.s32 2048, 2048
      %56 = vsyncadd [#allocation11], %s55
      %s57 = sshll.u32 [#allocation10], 4
      %s58 = int_to_ptr.vmem [resolvable:$true] %s57
      %63 = dma.hbm_to_vmem [thread:$0]  %s5, 2048, %s58, [#allocation11], 128, 128, 8
    $region21: #{tpu_custom_call.1} parent=1 // pred_fallthru
      _
    // Predicated region
    $region22: #{tpu_custom_call.1} parent=1 // pred_check
      _
    $region23: #{tpu_custom_call.1} parent=1 // pred_check_branch
      %65 = sbr.rel (0) target = $region25
    $region24: #{tpu_custom_call.1} parent=1 // pred_region
      %66 = dma.done [#allocation5], 128
    $region25: #{tpu_custom_call.1} parent=1 // pred_fallthru
      _
    // Predicated region
    $region26: #{tpu_custom_call.1} parent=1 // pred_check
      _
    $region27: #{tpu_custom_call.1} parent=1 // pred_check_branch
      %68 = sbr.rel (0) target = $region29
    $region28: #{tpu_custom_call.1} parent=1 // pred_region
      %69 = dma.done [#allocation8], 2048
    $region29: #{tpu_custom_call.1} parent=1 // pred_fallthru
      _
    // Predicated region
    $region30: #{tpu_custom_call.1} parent=1 // pred_check
      _
    $region31: #{tpu_custom_call.1} parent=1 // pred_check_branch
      %71 = sbr.rel (0) target = $region33
    $region32: #{tpu_custom_call.1} parent=1 // pred_region
      %72 = dma.done [#allocation8], 2048
    $region33: #{tpu_custom_call.1} parent=1 // pred_fallthru
      _
    // Predicated region
    $region34: #{tpu_custom_call.1} parent=1 // pred_check
      _
    $region35: #{tpu_custom_call.1} parent=1 // pred_check_branch
      %74 = sbr.rel (0) target = $region37
    $region36: #{tpu_custom_call.1} parent=1 // pred_region
      %75 = dma.done [#allocation11], 2048
    $region37: #{tpu_custom_call.1} parent=1 // pred_fallthru
      _
    %v76 = vld [vmem:[#allocation4] sm:$0xff]
    %v77 = vld [vmem:[#allocation9] sm:$0xff]
    %v78 = vld [vmem:[#allocation9 + $0x8] sm:$0xff]
    %v79 = vld [vmem:[#allocation9 + $0x10] sm:$0xff]
    %v80 = vld [vmem:[#allocation9 + $0x18] sm:$0xff]
    %v81 = vld [vmem:[#allocation9 + $0x20] sm:$0xff]
    %v82 = vld [vmem:[#allocation9 + $0x28] sm:$0xff]
    %v83 = vld [vmem:[#allocation9 + $0x30] sm:$0xff]
    %v84 = vld [vmem:[#allocation9 + $0x38] sm:$0xff]
    %v85 = vld [vmem:[#allocation9 + $0x40] sm:$0xff]
    %v86 = vld [vmem:[#allocation9 + $0x48] sm:$0xff]
    %v87 = vld [vmem:[#allocation9 + $0x50] sm:$0xff]
    %v88 = vld [vmem:[#allocation9 + $0x58] sm:$0xff]
    %v89 = vld [vmem:[#allocation9 + $0x60] sm:$0xff]
    %v90 = vld [vmem:[#allocation9 + $0x68] sm:$0xff]
    %v91 = vld [vmem:[#allocation9 + $0x70] sm:$0xff]
    %v92 = vld [vmem:[#allocation9 + $0x78] sm:$0xff]
    %s93 = smul.u32 0, 8
    %v94 = vlaneseq
    %v95 = vshrl.u32 %v94, 7
    %v96 = vstv %s93
    %v97 = vadd.s32 %v95, %v96
    %s98 = sld [smem:[#allocation3]]
    %v99 = vstv %s98
    %vm100 = vcmp.lt.s32.totalorder %v97, %v99
    %v101 = vld [vmem:[#allocation7] sm:$0xff]
    %v102 = vld [vmem:[#allocation7 + $0x8] sm:$0xff]
    %v103 = vld [vmem:[#allocation7 + $0x10] sm:$0xff]
    %v104 = vld [vmem:[#allocation7 + $0x18] sm:$0xff]
    %v105 = vld [vmem:[#allocation7 + $0x20] sm:$0xff]
    %v106 = vld [vmem:[#allocation7 + $0x28] sm:$0xff]
    %v107 = vld [vmem:[#allocation7 + $0x30] sm:$0xff]
    %v108 = vld [vmem:[#allocation7 + $0x38] sm:$0xff]
    %v109 = vld [vmem:[#allocation7 + $0x40] sm:$0xff]
    %v110 = vld [vmem:[#allocation7 + $0x48] sm:$0xff]
    %v111 = vld [vmem:[#allocation7 + $0x50] sm:$0xff]
    %v112 = vld [vmem:[#allocation7 + $0x58] sm:$0xff]
    %v113 = vld [vmem:[#allocation7 + $0x60] sm:$0xff]
    %v114 = vld [vmem:[#allocation7 + $0x68] sm:$0xff]
    %v115 = vld [vmem:[#allocation7 + $0x70] sm:$0xff]
    %v116 = vld [vmem:[#allocation7 + $0x78] sm:$0xff]
    %v117 = vld [vmem:[%s3] sm:$0x1]
    %v119 = vlaneseq
    %v120 = vshrl.u32 %v119, 7
    %v121 = vsub.s32 0, %v120
    %v122 = vrot.slane %v117, %v121
    %124 = vmatprep.subr.mxu0 0.0
    %125 = vmatpush1.msra.mxu0 %v116
    %126 = vmatprep.subr.mxu0 0.0
    %127 = vmatpush1.msra.mxu0 %v115
    %128 = vmatprep.subr.mxu0 0.0
    %129 = vmatpush1.msra.mxu0 %v114
    %130 = vmatprep.subr.mxu0 0.0
    %131 = vmatpush1.msra.mxu0 %v113
    %132 = vmatprep.subr.mxu0 0.0
    %133 = vmatpush1.msra.mxu0 %v112
    %134 = vmatprep.subr.mxu0 0.0
    %135 = vmatpush1.msra.mxu0 %v111
    %136 = vmatprep.subr.mxu0 0.0
    %137 = vmatpush1.msra.mxu0 %v110
    %138 = vmatprep.subr.mxu0 0.0
    %139 = vmatpush1.msra.mxu0 %v109
    %140 = vmatprep.subr.mxu0 0.0
    %141 = vmatpush1.msra.mxu0 %v108
    %142 = vmatprep.subr.mxu0 0.0
    %143 = vmatpush1.msra.mxu0 %v107
    %144 = vmatprep.subr.mxu0 0.0
    %145 = vmatpush1.msra.mxu0 %v106
    %146 = vmatprep.subr.mxu0 0.0
    %147 = vmatpush1.msra.mxu0 %v105
    %148 = vmatprep.subr.mxu0 0.0
    %149 = vmatpush1.msra.mxu0 %v104
    %150 = vmatprep.subr.mxu0 0.0
    %151 = vmatpush1.msra.mxu0 %v103
    %152 = vmatprep.subr.mxu0 0.0
    %153 = vmatpush1.msra.mxu0 %v102
    %154 = vmatprep.subr.mxu0 0.0
    %155 = vmatpush1.msra.mxu0 %v101
    %156 = vmatprep.subr.mxu0 0.0
    %157 = vmatpush2.msra.mxu0 0.0
    %158 = vmatprep.subr.mxu0 0.0
    %159 = vmatpush2.msra.mxu0 0.0
    %160 = vmatprep.subr.mxu0 0.0
    %161 = vmatpush2.msra.mxu0 0.0
    %162 = vmatprep.subr.mxu0 0.0
    %163 = vmatpush2.msra.mxu0 0.0
    %164 = vmatprep.subr.mxu0 0.0
    %165 = vmatpush2.msra.mxu0 0.0
    %166 = vmatprep.subr.mxu0 0.0
    %167 = vmatpush2.msra.mxu0 0.0
    %168 = vmatprep.subr.mxu0 0.0
    %169 = vmatpush2.msra.mxu0 0.0
    %170 = vmatprep.subr.mxu0 0.0
    %171 = vmatpush2.msra.mxu0 0.0
    %172 = vmatprep.subr.mxu0 0.0
    %173 = vmatpush2.msra.mxu0 0.0
    %174 = vmatprep.subr.mxu0 0.0
    %175 = vmatpush2.msra.mxu0 0.0
    %176 = vmatprep.subr.mxu0 0.0
    %177 = vmatpush2.msra.mxu0 0.0
    %178 = vmatprep.subr.mxu0 0.0
    %179 = vmatpush2.msra.mxu0 0.0
    %180 = vmatprep.subr.mxu0 0.0
    %181 = vmatpush2.msra.mxu0 0.0
    %182 = vmatprep.subr.mxu0 0.0
    %183 = vmatpush2.msra.mxu0 0.0
    %184 = vmatprep.subr.mxu0 0.0
    %185 = vmatpush2.msra.mxu0 0.0
    %186 = vmatprep.subr.mxu0 0.0
    %187 = vmatpush2.msra.mxu0 0.0
    %188 = vmatprep.mubr.f32.mxu0 0.0
    %189 = vmatmul.mubr.f32.gmra.mxu0 %v76
    %v190 = vpop.f32.mrf.mxu0
    %v191 = vadd.f32 %v122, %v190
    %v192 = vpop.f32.mrf.mxu0
    %193 = vdwg.mxu0
    %v194 = vsel %vm100, %v191, 0.0
    // While loop
    $region38: #{tpu_custom_call.1} parent=1 // loop_pre_header
      _
    $region39: #{tpu_custom_call.1} parent=1 // loop_header
      %v196 = vphi 0.0, %v380
      %v197 = vphi 0.0, %v379
      %v198 = vphi 1.0, %v388
      %v199 = vphi 0.0, %v395
      %s200 = sphi 0, %s396
      %vm201 = vcmask 1040384
      %v202 = vsel %vm201, %v198, 0.0
      %203 = vadd.xlane.f32.xlu0 %v202
      %v204 = vpop.xlane.xlu0 %203
      %v205 = vrot.slane %v204, 4
      %v206 = vadd.f32 %v204, %v205
      %v207 = vrot.slane %v206, 2
      %v208 = vadd.f32 %v206, %v207
      %v209 = vrot.slane %v208, 1
      %v210 = vadd.f32 %v208, %v209
      %s211 = vtos %v210
      %v212 = vsel %vm201, %v199, 0.0
      %213 = vadd.xlane.f32.xlu0 %v212
      %v214 = vpop.xlane.xlu0 %213
      %v215 = vrot.slane %v214, 4
      %v216 = vadd.f32 %v214, %v215
      %v217 = vrot.slane %v216, 2
      %v218 = vadd.f32 %v216, %v217
      %v219 = vrot.slane %v218, 1
      %v220 = vadd.f32 %v218, %v219
      %s221 = vtos %v220
      %s222 = smul.f32 %s221, 1e-10
      %p223 = scmp.gt.f32.partialorder %s211, %s222
      %p224 = scmp.lt.s32.totalorder %s200, 50
      %p225 = pnand %p223, %p224
      %p226 = pneg %p225
    $region40: #{tpu_custom_call.1} parent=1 // loop_header_branch
      %228 = sbr.rel (%p225) target = $region44
    $region41: #{tpu_custom_call.1} parent=1 // loop_body
      %v229 = vmul.f32 %v196, 2.0
      %v230 = vsub.f32 %v229, %v197
      %v231 = vadd.f32 %v230, %v194
      %232 = vmatprep.subr.mxu0 0.0
      %233 = vmatpush1.msra.mxu0 %v92
      %234 = vmatprep.subr.mxu0 0.0
      %235 = vmatpush1.msra.mxu0 %v91
      %236 = vmatprep.subr.mxu0 0.0
      %237 = vmatpush1.msra.mxu0 %v90
      %238 = vmatprep.subr.mxu0 0.0
      %239 = vmatpush1.msra.mxu0 %v89
      %240 = vmatprep.subr.mxu0 0.0
      %241 = vmatpush1.msra.mxu0 %v88
      %242 = vmatprep.subr.mxu0 0.0
      %243 = vmatpush1.msra.mxu0 %v87
      %244 = vmatprep.subr.mxu0 0.0
      %245 = vmatpush1.msra.mxu0 %v86
      %246 = vmatprep.subr.mxu0 0.0
      %247 = vmatpush1.msra.mxu0 %v85
      %248 = vmatprep.subr.mxu0 0.0
      %249 = vmatpush1.msra.mxu0 %v84
      %250 = vmatprep.subr.mxu0 0.0
      %251 = vmatpush1.msra.mxu0 %v83
      %252 = vmatprep.subr.mxu0 0.0
      %253 = vmatpush1.msra.mxu0 %v82
      %254 = vmatprep.subr.mxu0 0.0
      %255 = vmatpush1.msra.mxu0 %v81
      %256 = vmatprep.subr.mxu0 0.0
      %257 = vmatpush1.msra.mxu0 %v80
      %258 = vmatprep.subr.mxu0 0.0
      %259 = vmatpush1.msra.mxu0 %v79
      %260 = vmatprep.subr.mxu0 0.0
      %261 = vmatpush1.msra.mxu0 %v78
      %262 = vmatprep.subr.mxu0 0.0
      %263 = vmatpush1.msra.mxu0 %v77
      %264 = vmatprep.subr.mxu0 0.0
      %265 = vmatpush2.msra.mxu0 0.0
      %266 = vmatprep.subr.mxu0 0.0
      %267 = vmatpush2.msra.mxu0 0.0
      %268 = vmatprep.subr.mxu0 0.0
      %269 = vmatpush2.msra.mxu0 0.0
      %270 = vmatprep.subr.mxu0 0.0
      %271 = vmatpush2.msra.mxu0 0.0
      %272 = vmatprep.subr.mxu0 0.0
      %273 = vmatpush2.msra.mxu0 0.0
      %274 = vmatprep.subr.mxu0 0.0
      %275 = vmatpush2.msra.mxu0 0.0
      %276 = vmatprep.subr.mxu0 0.0
      %277 = vmatpush2.msra.mxu0 0.0
      %278 = vmatprep.subr.mxu0 0.0
      %279 = vmatpush2.msra.mxu0 0.0
      %280 = vmatprep.subr.mxu0 0.0
      %281 = vmatpush2.msra.mxu0 0.0
      %282 = vmatprep.subr.mxu0 0.0
      %283 = vmatpush2.msra.mxu0 0.0
      %284 = vmatprep.subr.mxu0 0.0
      %285 = vmatpush2.msra.mxu0 0.0
      %286 = vmatprep.subr.mxu0 0.0
      %287 = vmatpush2.msra.mxu0 0.0
      %288 = vmatprep.subr.mxu0 0.0
      %289 = vmatpush2.msra.mxu0 0.0
      %290 = vmatprep.subr.mxu0 0.0
      %291 = vmatpush2.msra.mxu0 0.0
      %292 = vmatprep.subr.mxu0 0.0
      %293 = vmatpush2.msra.mxu0 0.0
      %294 = vmatprep.subr.mxu0 0.0
      %295 = vmatpush2.msra.mxu0 0.0
      %296 = vmatprep.mubr.f32.mxu0 0.0
      %297 = vmatmul.mubr.f32.gmra.mxu0 %v231
      %v298 = vpop.f32.mrf.mxu0
      %v299 = vadd.f32 0.0, %v298
      %v300 = vpop.f32.mrf.mxu0
      %301 = vdwg.mxu0
      %v302 = vmul.f32 %v299, 2.0
      %v303 = vsub.f32 %v302, %v230
      %v304 = vmax.f32 %v303, 0.0
      %v305 = vmul.f32 %v304, 2.0
      %v306 = vsub.f32 %v305, %v303
      %v307 = vadd.f32 %v306, %v194
      %308 = vmatprep.subr.mxu0 0.0
      %309 = vmatpush1.msra.mxu0 %v92
      %310 = vmatprep.subr.mxu0 0.0
      %311 = vmatpush1.msra.mxu0 %v91
      %312 = vmatprep.subr.mxu0 0.0
      %313 = vmatpush1.msra.mxu0 %v90
      %314 = vmatprep.subr.mxu0 0.0
      %315 = vmatpush1.msra.mxu0 %v89
      %316 = vmatprep.subr.mxu0 0.0
      %317 = vmatpush1.msra.mxu0 %v88
      %318 = vmatprep.subr.mxu0 0.0
      %319 = vmatpush1.msra.mxu0 %v87
      %320 = vmatprep.subr.mxu0 0.0
      %321 = vmatpush1.msra.mxu0 %v86
      %322 = vmatprep.subr.mxu0 0.0
      %323 = vmatpush1.msra.mxu0 %v85
      %324 = vmatprep.subr.mxu0 0.0
      %325 = vmatpush1.msra.mxu0 %v84
      %326 = vmatprep.subr.mxu0 0.0
      %327 = vmatpush1.msra.mxu0 %v83
      %328 = vmatprep.subr.mxu0 0.0
      %329 = vmatpush1.msra.mxu0 %v82
      %330 = vmatprep.subr.mxu0 0.0
      %331 = vmatpush1.msra.mxu0 %v81
      %332 = vmatprep.subr.mxu0 0.0
      %333 = vmatpush1.msra.mxu0 %v80
      %334 = vmatprep.subr.mxu0 0.0
      %335 = vmatpush1.msra.mxu0 %v79
      %336 = vmatprep.subr.mxu0 0.0
      %337 = vmatpush1.msra.mxu0 %v78
      %338 = vmatprep.subr.mxu0 0.0
      %339 = vmatpush1.msra.mxu0 %v77
      %340 = vmatprep.subr.mxu0 0.0
      %341 = vmatpush2.msra.mxu0 0.0
      %342 = vmatprep.subr.mxu0 0.0
      %343 = vmatpush2.msra.mxu0 0.0
      %344 = vmatprep.subr.mxu0 0.0
      %345 = vmatpush2.msra.mxu0 0.0
      %346 = vmatprep.subr.mxu0 0.0
      %347 = vmatpush2.msra.mxu0 0.0
      %348 = vmatprep.subr.mxu0 0.0
      %349 = vmatpush2.msra.mxu0 0.0
      %350 = vmatprep.subr.mxu0 0.0
      %351 = vmatpush2.msra.mxu0 0.0
      %352 = vmatprep.subr.mxu0 0.0
      %353 = vmatpush2.msra.mxu0 0.0
      %354 = vmatprep.subr.mxu0 0.0
      %355 = vmatpush2.msra.mxu0 0.0
      %356 = vmatprep.subr.mxu0 0.0
      %357 = vmatpush2.msra.mxu0 0.0
      %358 = vmatprep.subr.mxu0 0.0
      %359 = vmatpush2.msra.mxu0 0.0
      %360 = vmatprep.subr.mxu0 0.0
      %361 = vmatpush2.msra.mxu0 0.0
      %362 = vmatprep.subr.mxu0 0.0
      %363 = vmatpush2.msra.mxu0 0.0
      %364 = vmatprep.subr.mxu0 0.0
      %365 = vmatpush2.msra.mxu0 0.0
      %366 = vmatprep.subr.mxu0 0.0
      %367 = vmatpush2.msra.mxu0 0.0
      %368 = vmatprep.subr.mxu0 0.0
      %369 = vmatpush2.msra.mxu0 0.0
      %370 = vmatprep.subr.mxu0 0.0
      %371 = vmatpush2.msra.mxu0 0.0
      %372 = vmatprep.mubr.f32.mxu0 0.0
      %373 = vmatmul.mubr.f32.gmra.mxu0 %v307
      %v374 = vpop.f32.mrf.mxu0
      %v375 = vadd.f32 0.0, %v374
      %v376 = vpop.f32.mrf.mxu0
      %377 = vdwg.mxu0
      %v378 = vmul.f32 %v375, 2.0
      %v379 = vsub.f32 %v378, %v306
      %v380 = vmax.f32 %v379, 0.0
      %v381 = vsub.f32 %v380, %v304
      %v382 = vmul.f32 %v381, %v381
      %v383 = vrot.slane %v382, 4
      %v384 = vadd.f32 %v382, %v383
      %v385 = vrot.slane %v384, 2
      %v386 = vadd.f32 %v384, %v385
      %v387 = vrot.slane %v386, 1
      %v388 = vadd.f32 %v386, %v387
      %v389 = vmul.f32 %v380, %v380
      %v390 = vrot.slane %v389, 4
      %v391 = vadd.f32 %v389, %v390
      %v392 = vrot.slane %v391, 2
      %v393 = vadd.f32 %v391, %v392
      %v394 = vrot.slane %v393, 1
      %v395 = vadd.f32 %v393, %v394
      %s396 = sadd.s32 %s200, 2
    $region42: #{tpu_custom_call.1} parent=1 // loop_footer
      _
    $region43: #{tpu_custom_call.1} parent=1 // loop_footer_branch
      %195 = sbr.rel target = $region39
    $region44: #{tpu_custom_call.1} parent=1 // loop_exit
      _
    %v397 = vld [vmem:[#allocation10] sm:$0xff]
    %v398 = vld [vmem:[#allocation10 + $0x8] sm:$0xff]
    %v399 = vld [vmem:[#allocation10 + $0x10] sm:$0xff]
    %v400 = vld [vmem:[#allocation10 + $0x18] sm:$0xff]
    %v401 = vld [vmem:[#allocation10 + $0x20] sm:$0xff]
    %v402 = vld [vmem:[#allocation10 + $0x28] sm:$0xff]
    %v403 = vld [vmem:[#allocation10 + $0x30] sm:$0xff]
    %v404 = vld [vmem:[#allocation10 + $0x38] sm:$0xff]
    %v405 = vld [vmem:[#allocation10 + $0x40] sm:$0xff]
    %v406 = vld [vmem:[#allocation10 + $0x48] sm:$0xff]
    %v407 = vld [vmem:[#allocation10 + $0x50] sm:$0xff]
    %v408 = vld [vmem:[#allocation10 + $0x58] sm:$0xff]
    %v409 = vld [vmem:[#allocation10 + $0x60] sm:$0xff]
    %v410 = vld [vmem:[#allocation10 + $0x68] sm:$0xff]
    %v411 = vld [vmem:[#allocation10 + $0x70] sm:$0xff]
    %v412 = vld [vmem:[#allocation10 + $0x78] sm:$0xff]
    %413 = vmatprep.subr.mxu0 0.0
    %414 = vmatpush1.msra.mxu0 %v412
    %415 = vmatprep.subr.mxu0 0.0
    %416 = vmatpush1.msra.mxu0 %v411
    %417 = vmatprep.subr.mxu0 0.0
    %418 = vmatpush1.msra.mxu0 %v410
    %419 = vmatprep.subr.mxu0 0.0
    %420 = vmatpush1.msra.mxu0 %v409
    %421 = vmatprep.subr.mxu0 0.0
    %422 = vmatpush1.msra.mxu0 %v408
    %423 = vmatprep.subr.mxu0 0.0
    %424 = vmatpush1.msra.mxu0 %v407
    %425 = vmatprep.subr.mxu0 0.0
    %426 = vmatpush1.msra.mxu0 %v406
    %427 = vmatprep.subr.mxu0 0.0
    %428 = vmatpush1.msra.mxu0 %v405
    %429 = vmatprep.subr.mxu0 0.0
    %430 = vmatpush1.msra.mxu0 %v404
    %431 = vmatprep.subr.mxu0 0.0
    %432 = vmatpush1.msra.mxu0 %v403
    %433 = vmatprep.subr.mxu0 0.0
    %434 = vmatpush1.msra.mxu0 %v402
    %435 = vmatprep.subr.mxu0 0.0
    %436 = vmatpush1.msra.mxu0 %v401
    %437 = vmatprep.subr.mxu0 0.0
    %438 = vmatpush1.msra.mxu0 %v400
    %439 = vmatprep.subr.mxu0 0.0
    %440 = vmatpush1.msra.mxu0 %v399
    %441 = vmatprep.subr.mxu0 0.0
    %442 = vmatpush1.msra.mxu0 %v398
    %443 = vmatprep.subr.mxu0 0.0
    %444 = vmatpush1.msra.mxu0 %v397
    %445 = vmatprep.subr.mxu0 0.0
    %446 = vmatpush2.msra.mxu0 0.0
    %447 = vmatprep.subr.mxu0 0.0
    %448 = vmatpush2.msra.mxu0 0.0
    %449 = vmatprep.subr.mxu0 0.0
    %450 = vmatpush2.msra.mxu0 0.0
    %451 = vmatprep.subr.mxu0 0.0
    %452 = vmatpush2.msra.mxu0 0.0
    %453 = vmatprep.subr.mxu0 0.0
    %454 = vmatpush2.msra.mxu0 0.0
    %455 = vmatprep.subr.mxu0 0.0
    %456 = vmatpush2.msra.mxu0 0.0
    %457 = vmatprep.subr.mxu0 0.0
    %458 = vmatpush2.msra.mxu0 0.0
    %459 = vmatprep.subr.mxu0 0.0
    %460 = vmatpush2.msra.mxu0 0.0
    %461 = vmatprep.subr.mxu0 0.0
    %462 = vmatpush2.msra.mxu0 0.0
    %463 = vmatprep.subr.mxu0 0.0
    %464 = vmatpush2.msra.mxu0 0.0
    %465 = vmatprep.subr.mxu0 0.0
    %466 = vmatpush2.msra.mxu0 0.0
    %467 = vmatprep.subr.mxu0 0.0
    %468 = vmatpush2.msra.mxu0 0.0
    %469 = vmatprep.subr.mxu0 0.0
    %470 = vmatpush2.msra.mxu0 0.0
    %471 = vmatprep.subr.mxu0 0.0
    %472 = vmatpush2.msra.mxu0 0.0
    %473 = vmatprep.subr.mxu0 0.0
    %474 = vmatpush2.msra.mxu0 0.0
    %475 = vmatprep.subr.mxu0 0.0
    %476 = vmatpush2.msra.mxu0 0.0
    %477 = vmatprep.mubr.f32.mxu0 0.0
    %478 = vmatmul.mubr.f32.gmra.mxu0 %v196
    %v479 = vpop.f32.mrf.mxu0
    %v480 = vadd.f32 0.0, %v479
    %v481 = vpop.f32.mrf.mxu0
    %482 = vdwg.mxu0
    %v483 = vadd.f32 %v194, %v480
    %v484 = vmax.f32 %v483, 0.0
    %485 = vst [vmem:[#allocation12] sm:$0xff] %v484
    // Predicated region
    $region45: #{tpu_custom_call.1} parent=1 // pred_check
      _
    $region46: #{tpu_custom_call.1} parent=1 // pred_check_branch
      %487 = sbr.rel (0) target = $region48
    $region47: #{tpu_custom_call.1} parent=1 // pred_region
      %s489 = ssub.s32 128, 128
      %490 = vsyncadd [#allocation6], %s489
      %s492 = sshll.u32 [#allocation12], 4
      %s493 = int_to_ptr.vmem [resolvable:$true] %s492
      %495 = dma.vmem_to_hbm [thread:$0]  %s493, 128, %s6, [#allocation6]
    $region48: #{tpu_custom_call.1} parent=1 // pred_fallthru
      _
    // Predicated region
    $region49: #{tpu_custom_call.1} parent=1 // pred_check
      _
    $region50: #{tpu_custom_call.1} parent=1 // pred_check_branch
      %497 = sbr.rel (0) target = $region52
    $region51: #{tpu_custom_call.1} parent=1 // pred_region
      %498 = dma.done [#allocation6], 128
    $region52: #{tpu_custom_call.1} parent=1 // pred_fallthru
      _
    %499 = vsyncpa [#allocation5], 1
    %500 = vsyncpa [#allocation8], 1
    %501 = vsyncpa [#allocation11], 1
    %502 = vsyncpa [#allocation6], 1

</llo_original>
